<compile_context>
chip_gen: v5e
topology: v5e:2x2
jax: 0.10.0
libtpu: 0.0.40
codegen_flags: <defaults>
</compile_context>

<pallas_src>
import jax
import jax.numpy as jnp
import numpy as np
from jax import lax
from jax.experimental import pallas as pl
from jax.experimental.pallas import tpu as pltpu

EPS = 1e-5  # nn.BatchNorm2d default eps


# ----------------------------------------------------------------------------
# Fused per-level kernel: conv3x3 + BN + ReLU + bilinear x2 + skip add
# ----------------------------------------------------------------------------
def _fpn_level_kernel(x_ref, a_ref, r_ref, b_ref, rowm_ref, colm_ref,
                      skip_ref, o_ref):
    """One batch image per grid step, lane-dense (W*C on lanes).

    x_ref   : (1, H, W*C)      conv input
    a_ref   : (3, W*C, W*C)    per-dh conv matrices (dw/channel mix, BN scale folded)
    r_ref   : (2, H, H)        row-shift matrices for dh=0 and dh=2
    b_ref   : (1, W*C)         BN bias tiled over W
    rowm_ref: (2H, H)          bilinear row-interpolation matrix
    colm_ref: (W*C, 2*W*C)     bilinear column-interpolation matrix (kron I_C)
    skip_ref: (1, 2H, 2*W*C)
    o_ref   : (1, 2H, 2*W*C)
    """
    f32 = jnp.float32
    x = x_ref[0]                                                   # (H, WC)

    # --- 3x3 conv (zero padding) as three row-shifted matmuls; BN scale folded.
    y = jnp.dot(x, a_ref[1], preferred_element_type=f32)           # dh = 1
    y = y + jnp.dot(jnp.dot(r_ref[0], x, preferred_element_type=f32),
                    a_ref[0], preferred_element_type=f32)          # dh = 0
    y = y + jnp.dot(jnp.dot(r_ref[1], x, preferred_element_type=f32),
                    a_ref[2], preferred_element_type=f32)          # dh = 2

    # --- BN bias + ReLU.
    y = jnp.maximum(y + b_ref[...], 0.0)                           # (H, WC)

    # --- bilinear x2 upsample (align_corners=False), separable row/col matmuls.
    up = jnp.dot(jnp.dot(rowm_ref[...], y, preferred_element_type=f32),
                 colm_ref[...], preferred_element_type=f32)        # (2H, 2WC)

    # --- skip add, lane-dense store.
    o_ref[0] = (up + skip_ref[0]).astype(o_ref.dtype)


# ----------------------------------------------------------------------------
# Host-side (trace-time) matrix builders
# ----------------------------------------------------------------------------
def _row_shift_mats(H):
    # (R @ x)[i] = x[i + dh - 1] with zero padding; dh = 0 and dh = 2.
    return np.stack([np.eye(H, H, k=-1, dtype=np.float32),
                     np.eye(H, H, k=+1, dtype=np.float32)])


def _bilinear_idx(out_n, in_n):
    # PyTorch bilinear, align_corners=False, scale factor 2.
    o = np.arange(out_n, dtype=np.float64)
    src = np.clip((o + 0.5) / 2.0 - 0.5, 0.0, in_n - 1.0)
    i0 = np.floor(src).astype(np.int64)
    i1 = np.minimum(i0 + 1, in_n - 1)
    t = src - i0
    return i0, i1, t


def _row_upsample_mat(H):
    i0, i1, t = _bilinear_idx(2 * H, H)
    M = np.zeros((2 * H, H), np.float64)
    M[np.arange(2 * H), i0] += (1.0 - t)
    M[np.arange(2 * H), i1] += t
    return M.astype(np.float32)                                    # (2H, H)


def _col_upsample_mat(W, C):
    j0, j1, t = _bilinear_idx(2 * W, W)
    E = np.zeros((W, 2 * W), np.float64)
    E[j0, np.arange(2 * W)] += (1.0 - t)
    E[j1, np.arange(2 * W)] += t
    return np.kron(E.astype(np.float32),
                   np.eye(C, dtype=np.float32))                    # (WC, 2WC)


def _conv_mats(w, scale, W):
    """Build the three (W*C, W*C) matrices A_dh (column shift + channel mix +
    zero padding in W + folded BN scale) from torch-layout weights.

    w: (Cout, Cin, 3, 3), scale: (Cout,)
    """
    C = w.shape[0]
    w_hwio = jnp.transpose(w, (2, 3, 1, 0)) * scale[None, None, None, :]
    mats = []
    for dh in range(3):
        a = jnp.zeros((W * C, W * C), jnp.float32)
        for dw in range(3):
            # E[j_in, j_out] = 1  iff  j_in = j_out + dw - 1 (OOB -> zero pad)
            E = np.eye(W, W, k=1 - dw, dtype=np.float32)
            a = a + jnp.kron(jnp.asarray(E), w_hwio[dh, dw])
        mats.append(a)
    return jnp.stack(mats)                                          # (3, WC, WC)


# ----------------------------------------------------------------------------
# Per-level wrapper
# ----------------------------------------------------------------------------
def fpn_level(x, skip, w, scale, bias):
    """x: (N,H,W,C) NHWC, skip: (N,2H,2W,C) -> bilinear2x(convBNReLU(x)) + skip."""
    N, H, W, C = x.shape
    WC = W * C
    H2, W2 = 2 * H, 2 * W
    assert skip.shape == (N, H2, W2, C)

    a_mats = _conv_mats(w, scale, W)                               # (3, WC, WC)
    r_mats = jnp.asarray(_row_shift_mats(H))                       # (2, H, H)
    rowm = jnp.asarray(_row_upsample_mat(H))                       # (2H, H)
    colm = jnp.asarray(_col_upsample_mat(W, C))                    # (WC, 2WC)
    bias_t = jnp.tile(bias, W).reshape(1, WC)                      # (1, WC)

    # Free (row-major) reshapes to lane-dense slabs -- no HBM transpose passes.
    x2 = x.reshape(N, H, WC)
    skip2 = skip.reshape(N, H2, W2 * C)

    out = pl.pallas_call(
        _fpn_level_kernel,
        out_shape=jax.ShapeDtypeStruct((N, H2, W2 * C), x.dtype),
        grid=(N,),
        in_specs=[
            pl.BlockSpec((1, H, WC), lambda n: (n, 0, 0)),         # x
            pl.BlockSpec((3, WC, WC), lambda n: (0, 0, 0)),        # conv mats (resident)
            pl.BlockSpec((2, H, H), lambda n: (0, 0, 0)),          # row shifts (resident)
            pl.BlockSpec((1, WC), lambda n: (0, 0)),               # bias (resident)
            pl.BlockSpec((H2, H), lambda n: (0, 0)),               # row interp (resident)
            pl.BlockSpec((WC, W2 * C), lambda n: (0, 0)),          # col interp (resident)
            pl.BlockSpec((1, H2, W2 * C), lambda n: (n, 0, 0)),    # skip
        ],
        out_specs=pl.BlockSpec((1, H2, W2 * C), lambda n: (n, 0, 0)),
        compiler_params=pltpu.CompilerParams(
            dimension_semantics=("parallel",)),
    )(x2, a_mats, r_mats, bias_t, rowm, colm, skip2)

    return out.reshape(N, H2, W2, C)                               # free reshape


# ----------------------------------------------------------------------------
# FPN forward (NCHW boundary like the PyTorch module, NHWC/lane-dense inside)
# ----------------------------------------------------------------------------
def fpn_forward(params, x1, x2, x3, x4):
    to_nhwc = lambda t: jnp.transpose(t, (0, 2, 3, 1))
    to_nchw = lambda t: jnp.transpose(t, (0, 3, 1, 2))
    a1, a2, a3, a4 = map(to_nhwc, (x1, x2, x3, x4))

    p4, p3, p2 = params["conv4"], params["conv3"], params["conv2"]
    a3 = fpn_level(a4, a3, p4["w"], p4["scale"], p4["bias"])
    a2 = fpn_level(a3, a2, p3["w"], p3["scale"], p3["bias"])
    a1 = fpn_level(a2, a1, p2["w"], p2["scale"], p2["bias"])

    return to_nchw(a1), to_nchw(a2), to_nchw(a3), x4


# ----------------------------------------------------------------------------
# Deterministic parameter init (BasicConv2d(channel, channel, 3, 1, 1) shapes)
# ----------------------------------------------------------------------------
def init_params(channel, key):
    params = {}
    for name, k in zip(["conv2", "conv3", "conv4"], jax.random.split(key, 3)):
        kw, kg, kb, km, kv = jax.random.split(k, 5)
        w = 0.1 * jax.random.normal(kw, (channel, channel, 3, 3), jnp.float32)
        gamma = 1.0 + 0.1 * jax.random.normal(kg, (channel,), jnp.float32)
        beta = 0.1 * jax.random.normal(kb, (channel,), jnp.float32)
        rmean = 0.1 * jax.random.normal(km, (channel,), jnp.float32)
        rvar = 1.0 + 0.5 * jax.random.uniform(kv, (channel,), jnp.float32)
        scale = gamma / jnp.sqrt(rvar + EPS)
        bias = beta - rmean * scale
        params[name] = dict(w=w, scale=scale, bias=bias)
    return params


# ----------------------------------------------------------------------------
# Pure-JAX reference (independent code path) for verification
# ----------------------------------------------------------------------------
def _ref_conv_bn_relu(x, w, scale, bias):
    w_hwio = jnp.transpose(w, (2, 3, 1, 0))
    y = lax.conv_general_dilated(
        x, w_hwio, (1, 1), ((1, 1), (1, 1)),
        dimension_numbers=("NHWC", "HWIO", "NHWC"),
        precision=lax.Precision.HIGHEST)
    y = y * scale.reshape(1, 1, 1, -1) + bias.reshape(1, 1, 1, -1)
    return jnp.maximum(y, 0.0)


def _ref_upsample2x(y):
    N, H, W, C = y.shape

    def idx(out_n, in_n):
        o = jnp.arange(out_n, dtype=jnp.float32)
        src = jnp.clip((o + 0.5) / 2.0 - 0.5, 0.0, in_n - 1.0)
        i0 = jnp.floor(src).astype(jnp.int32)
        i1 = jnp.minimum(i0 + 1, in_n - 1)
        t = src - i0.astype(jnp.float32)
        return i0, i1, t

    i0, i1, t = idx(2 * H, H)
    yr = y[:, i0] * (1 - t)[None, :, None, None] + y[:, i1] * t[None, :, None, None]
    j0, j1, s = idx(2 * W, W)
    return yr[:, :, j0] * (1 - s)[None, None, :, None] + yr[:, :, j1] * s[None, None, :, None]


def _ref_fpn(params, x1, x2, x3, x4):
    to_nhwc = lambda t: jnp.transpose(t, (0, 2, 3, 1))
    to_nchw = lambda t: jnp.transpose(t, (0, 3, 1, 2))
    a1, a2, a3, a4 = map(to_nhwc, (x1, x2, x3, x4))
    p4, p3, p2 = params["conv4"], params["conv3"], params["conv2"]
    a3 = _ref_upsample2x(_ref_conv_bn_relu(a4, p4["w"], p4["scale"], p4["bias"])) + a3
    a2 = _ref_upsample2x(_ref_conv_bn_relu(a3, p3["w"], p3["scale"], p3["bias"])) + a2
    a1 = _ref_upsample2x(_ref_conv_bn_relu(a2, p2["w"], p2["scale"], p2["bias"])) + a1
    return to_nchw(a1), to_nchw(a2), to_nchw(a3), x4


# ----------------------------------------------------------------------------
if __name__ == "__main__":
    channel = 4
    N = 2
    key = jax.random.PRNGKey(0)
    kp, k1, k2, k3, k4 = jax.random.split(key, 5)

    params = init_params(channel, kp)
    x1 = jax.random.normal(k1, (N, channel, 32, 32), jnp.float32)
    x2 = jax.random.normal(k2, (N, channel, 16, 16), jnp.float32)
    x3 = jax.random.normal(k3, (N, channel, 8, 8), jnp.float32)
    x4 = jax.random.normal(k4, (N, channel, 4, 4), jnp.float32)

    outs = jax.jit(fpn_forward)(params, x1, x2, x3, x4)
    outs = jax.block_until_ready(outs)

    refs = _ref_fpn(params, x1, x2, x3, x4)
    for o, r in zip(outs, refs):
        np.testing.assert_allclose(np.asarray(o), np.asarray(r), rtol=2e-3, atol=2e-3)

    print("KERNEL_OK")
</pallas_src>

<mosaic_0001>
module attributes {stable_mosaic.version = 11 : i64} {
  func.func @_fpn_level_kernel(%arg0: i32, %arg1: memref<1x4x16xf32, #tpu.memory_space<vmem>>, %arg2: memref<3x16x16xf32, #tpu.memory_space<vmem>>, %arg3: memref<2x4x4xf32, #tpu.memory_space<vmem>>, %arg4: memref<1x16xf32, #tpu.memory_space<vmem>>, %arg5: memref<8x4xf32, #tpu.memory_space<vmem>>, %arg6: memref<16x32xf32, #tpu.memory_space<vmem>>, %arg7: memref<1x8x32xf32, #tpu.memory_space<vmem>>, %arg8: memref<1x8x32xf32, #tpu.memory_space<vmem>>) attributes {dimension_semantics = [#tpu.dimension_semantics<parallel>], iteration_bounds = array<i64: 2>, scalar_prefetch = 0 : i64, scratch_operands = 0 : i64, tpu.core_type = #tpu.core_type<tc>, window_params = [{transform_indices = @transform_0, window_bounds = array<i64: 1, 4, 16>}, {pipeline_mode = #tpu.pipeline_mode<synchronous>, transform_indices = @transform_1, window_bounds = array<i64: 3, 16, 16>}, {pipeline_mode = #tpu.pipeline_mode<synchronous>, transform_indices = @transform_2, window_bounds = array<i64: 2, 4, 4>}, {pipeline_mode = #tpu.pipeline_mode<synchronous>, transform_indices = @transform_3, window_bounds = array<i64: 1, 16>}, {pipeline_mode = #tpu.pipeline_mode<synchronous>, transform_indices = @transform_4, window_bounds = array<i64: 8, 4>}, {pipeline_mode = #tpu.pipeline_mode<synchronous>, transform_indices = @transform_5, window_bounds = array<i64: 16, 32>}, {transform_indices = @transform_6, window_bounds = array<i64: 1, 8, 32>}, {transform_indices = @transform_7, window_bounds = array<i64: 1, 8, 32>}]} {
    %c0 = arith.constant 0 : index
    %c0_0 = arith.constant 0 : index
    %c0_1 = arith.constant 0 : index
    %0 = vector.load %arg1[%c0, %c0_0, %c0_1] : memref<1x4x16xf32, #tpu.memory_space<vmem>>, vector<1x4x16xf32>
    %1 = vector.shape_cast %0 : vector<1x4x16xf32> to vector<4x16xf32>
    %c1 = arith.constant 1 : index
    %c0_2 = arith.constant 0 : index
    %c0_3 = arith.constant 0 : index
    %2 = vector.load %arg2[%c1, %c0_2, %c0_3] : memref<3x16x16xf32, #tpu.memory_space<vmem>>, vector<1x16x16xf32>
    %3 = vector.shape_cast %2 : vector<1x16x16xf32> to vector<16x16xf32>
    %cst = arith.constant dense<0.000000e+00> : vector<4x16xf32>
    %4 = tpu.matmul %1, %3, %cst {dimension_numbers = #tpu.dot_dimension_numbers<[1], [0], [0], [1], [0, 0, 1, 1], [], []>} : vector<4x16xf32>, vector<16x16xf32>, vector<4x16xf32> -> vector<4x16xf32>
    %c0_4 = arith.constant 0 : index
    %c0_5 = arith.constant 0 : index
    %c0_6 = arith.constant 0 : index
    %5 = vector.load %arg3[%c0_4, %c0_5, %c0_6] : memref<2x4x4xf32, #tpu.memory_space<vmem>>, vector<1x4x4xf32>
    %6 = vector.shape_cast %5 : vector<1x4x4xf32> to vector<4x4xf32>
    %cst_7 = arith.constant dense<0.000000e+00> : vector<4x16xf32>
    %7 = tpu.matmul %6, %1, %cst_7 {dimension_numbers = #tpu.dot_dimension_numbers<[1], [0], [0], [1], [0, 0, 1, 1], [], []>} : vector<4x4xf32>, vector<4x16xf32>, vector<4x16xf32> -> vector<4x16xf32>
    %c0_8 = arith.constant 0 : index
    %c0_9 = arith.constant 0 : index
    %c0_10 = arith.constant 0 : index
    %8 = vector.load %arg2[%c0_8, %c0_9, %c0_10] : memref<3x16x16xf32, #tpu.memory_space<vmem>>, vector<1x16x16xf32>
    %9 = vector.shape_cast %8 : vector<1x16x16xf32> to vector<16x16xf32>
    %cst_11 = arith.constant dense<0.000000e+00> : vector<4x16xf32>
    %10 = tpu.matmul %7, %9, %cst_11 {dimension_numbers = #tpu.dot_dimension_numbers<[1], [0], [0], [1], [0, 0, 1, 1], [], []>} : vector<4x16xf32>, vector<16x16xf32>, vector<4x16xf32> -> vector<4x16xf32>
    %11 = arith.addf %4, %10 : vector<4x16xf32>
    %c1_12 = arith.constant 1 : index
    %c0_13 = arith.constant 0 : index
    %c0_14 = arith.constant 0 : index
    %12 = vector.load %arg3[%c1_12, %c0_13, %c0_14] : memref<2x4x4xf32, #tpu.memory_space<vmem>>, vector<1x4x4xf32>
    %13 = vector.shape_cast %12 : vector<1x4x4xf32> to vector<4x4xf32>
    %cst_15 = arith.constant dense<0.000000e+00> : vector<4x16xf32>
    %14 = tpu.matmul %13, %1, %cst_15 {dimension_numbers = #tpu.dot_dimension_numbers<[1], [0], [0], [1], [0, 0, 1, 1], [], []>} : vector<4x4xf32>, vector<4x16xf32>, vector<4x16xf32> -> vector<4x16xf32>
    %c2 = arith.constant 2 : index
    %c0_16 = arith.constant 0 : index
    %c0_17 = arith.constant 0 : index
    %15 = vector.load %arg2[%c2, %c0_16, %c0_17] : memref<3x16x16xf32, #tpu.memory_space<vmem>>, vector<1x16x16xf32>
    %16 = vector.shape_cast %15 : vector<1x16x16xf32> to vector<16x16xf32>
    %cst_18 = arith.constant dense<0.000000e+00> : vector<4x16xf32>
    %17 = tpu.matmul %14, %16, %cst_18 {dimension_numbers = #tpu.dot_dimension_numbers<[1], [0], [0], [1], [0, 0, 1, 1], [], []>} : vector<4x16xf32>, vector<16x16xf32>, vector<4x16xf32> -> vector<4x16xf32>
    %18 = arith.addf %11, %17 : vector<4x16xf32>
    %c0_19 = arith.constant 0 : index
    %c0_20 = arith.constant 0 : index
    %19 = vector.load %arg4[%c0_19, %c0_20] : memref<1x16xf32, #tpu.memory_space<vmem>>, vector<1x16xf32>
    %20 = vector.broadcast %19 : vector<1x16xf32> to vector<4x16xf32>
    %21 = arith.addf %18, %20 : vector<4x16xf32>
    %cst_21 = arith.constant 0.000000e+00 : f32
    %22 = vector.broadcast %cst_21 : f32 to vector<4x16xf32>
    %23 = arith.maximumf %21, %22 : vector<4x16xf32>
    %c0_22 = arith.constant 0 : index
    %c0_23 = arith.constant 0 : index
    %24 = vector.load %arg5[%c0_22, %c0_23] : memref<8x4xf32, #tpu.memory_space<vmem>>, vector<8x4xf32>
    %cst_24 = arith.constant dense<0.000000e+00> : vector<8x16xf32>
    %25 = tpu.matmul %24, %23, %cst_24 {dimension_numbers = #tpu.dot_dimension_numbers<[1], [0], [0], [1], [0, 0, 1, 1], [], []>} : vector<8x4xf32>, vector<4x16xf32>, vector<8x16xf32> -> vector<8x16xf32>
    %c0_25 = arith.constant 0 : index
    %c0_26 = arith.constant 0 : index
    %26 = vector.load %arg6[%c0_25, %c0_26] : memref<16x32xf32, #tpu.memory_space<vmem>>, vector<16x32xf32>
    %cst_27 = arith.constant dense<0.000000e+00> : vector<8x32xf32>
    %27 = tpu.matmul %25, %26, %cst_27 {dimension_numbers = #tpu.dot_dimension_numbers<[1], [0], [0], [1], [0, 0, 1, 1], [], []>} : vector<8x16xf32>, vector<16x32xf32>, vector<8x32xf32> -> vector<8x32xf32>
    %c0_28 = arith.constant 0 : index
    %c0_29 = arith.constant 0 : index
    %c0_30 = arith.constant 0 : index
    %28 = vector.load %arg7[%c0_28, %c0_29, %c0_30] : memref<1x8x32xf32, #tpu.memory_space<vmem>>, vector<1x8x32xf32>
    %29 = vector.shape_cast %28 : vector<1x8x32xf32> to vector<8x32xf32>
    %30 = arith.addf %27, %29 : vector<8x32xf32>
    %c0_31 = arith.constant 0 : index
    %c0_32 = arith.constant 0 : index
    %c0_33 = arith.constant 0 : index
    %31 = vector.load %arg8[%c0_31, %c0_32, %c0_33] : memref<1x8x32xf32, #tpu.memory_space<vmem>>, vector<1x8x32xf32>
    %32 = vector.shape_cast %31 : vector<1x8x32xf32> to vector<8x32xf32>
    %33 = vector.shape_cast %30 : vector<8x32xf32> to vector<1x8x32xf32>
    tpu.vector_store %arg8[%c0_31, %c0_32, %c0_33], %33 {strides = array<i32>} : memref<1x8x32xf32, #tpu.memory_space<vmem>>, vector<1x8x32xf32>,
    return
  }
  func.func @transform_0(%arg0: i32) -> (i32, i32, i32) {
    %c0_i32 = arith.constant 0 : i32
    %c0_i32_0 = arith.constant 0 : i32
    %c0_i32_1 = arith.constant 0 : i32
    return %arg0, %c0_i32, %c0_i32_0 : i32, i32, i32
  }
  func.func @transform_1(%arg0: i32) -> (i32, i32, i32) {
    %c0_i32 = arith.constant 0 : i32
    %c0_i32_0 = arith.constant 0 : i32
    %c0_i32_1 = arith.constant 0 : i32
    %c0_i32_2 = arith.constant 0 : i32
    return %c0_i32, %c0_i32_0, %c0_i32_1 : i32, i32, i32
  }
  func.func @transform_2(%arg0: i32) -> (i32, i32, i32) {
    %c0_i32 = arith.constant 0 : i32
    %c0_i32_0 = arith.constant 0 : i32
    %c0_i32_1 = arith.constant 0 : i32
    %c0_i32_2 = arith.constant 0 : i32
    return %c0_i32, %c0_i32_0, %c0_i32_1 : i32, i32, i32
  }
  func.func @transform_3(%arg0: i32) -> (i32, i32) {
    %c0_i32 = arith.constant 0 : i32
    %c0_i32_0 = arith.constant 0 : i32
    %c0_i32_1 = arith.constant 0 : i32
    return %c0_i32, %c0_i32_0 : i32, i32
  }
  func.func @transform_4(%arg0: i32) -> (i32, i32) {
    %c0_i32 = arith.constant 0 : i32
    %c0_i32_0 = arith.constant 0 : i32
    %c0_i32_1 = arith.constant 0 : i32
    return %c0_i32, %c0_i32_0 : i32, i32
  }
  func.func @transform_5(%arg0: i32) -> (i32, i32) {
    %c0_i32 = arith.constant 0 : i32
    %c0_i32_0 = arith.constant 0 : i32
    %c0_i32_1 = arith.constant 0 : i32
    return %c0_i32, %c0_i32_0 : i32, i32
  }
  func.func @transform_6(%arg0: i32) -> (i32, i32, i32) {
    %c0_i32 = arith.constant 0 : i32
    %c0_i32_0 = arith.constant 0 : i32
    %c0_i32_1 = arith.constant 0 : i32
    return %arg0, %c0_i32, %c0_i32_0 : i32, i32, i32
  }
  func.func @transform_7(%arg0: i32) -> (i32, i32, i32) {
    %c0_i32 = arith.constant 0 : i32
    %c0_i32_0 = arith.constant 0 : i32
    %c0_i32_1 = arith.constant 0 : i32
    return %arg0, %c0_i32, %c0_i32_0 : i32, i32, i32
  }
}

module attributes {stable_mosaic.version = 11 : i64} {
  func.func @_fpn_level_kernel(%arg0: i32, %arg1: memref<1x8x32xf32, #tpu.memory_space<vmem>>, %arg2: memref<3x32x32xf32, #tpu.memory_space<vmem>>, %arg3: memref<2x8x8xf32, #tpu.memory_space<vmem>>, %arg4: memref<1x32xf32, #tpu.memory_space<vmem>>, %arg5: memref<16x8xf32, #tpu.memory_space<vmem>>, %arg6: memref<32x64xf32, #tpu.memory_space<vmem>>, %arg7: memref<1x16x64xf32, #tpu.memory_space<vmem>>, %arg8: memref<1x16x64xf32, #tpu.memory_space<vmem>>) attributes {dimension_semantics = [#tpu.dimension_semantics<parallel>], iteration_bounds = array<i64: 2>, scalar_prefetch = 0 : i64, scratch_operands = 0 : i64, tpu.core_type = #tpu.core_type<tc>, window_params = [{transform_indices = @transform_0, window_bounds = array<i64: 1, 8, 32>}, {pipeline_mode = #tpu.pipeline_mode<synchronous>, transform_indices = @transform_1, window_bounds = array<i64: 3, 32, 32>}, {pipeline_mode = #tpu.pipeline_mode<synchronous>, transform_indices = @transform_2, window_bounds = array<i64: 2, 8, 8>}, {pipeline_mode = #tpu.pipeline_mode<synchronous>, transform_indices = @transform_3, window_bounds = array<i64: 1, 32>}, {pipeline_mode = #tpu.pipeline_mode<synchronous>, transform_indices = @transform_4, window_bounds = array<i64: 16, 8>}, {pipeline_mode = #tpu.pipeline_mode<synchronous>, transform_indices = @transform_5, window_bounds = array<i64: 32, 64>}, {transform_indices = @transform_6, window_bounds = array<i64: 1, 16, 64>}, {transform_indices = @transform_7, window_bounds = array<i64: 1, 16, 64>}]} {
    %c0 = arith.constant 0 : index
    %c0_0 = arith.constant 0 : index
    %c0_1 = arith.constant 0 : index
    %0 = vector.load %arg1[%c0, %c0_0, %c0_1] : memref<1x8x32xf32, #tpu.memory_space<vmem>>, vector<1x8x32xf32>
    %1 = vector.shape_cast %0 : vector<1x8x32xf32> to vector<8x32xf32>
    %c1 = arith.constant 1 : index
    %c0_2 = arith.constant 0 : index
    %c0_3 = arith.constant 0 : index
    %2 = vector.load %arg2[%c1, %c0_2, %c0_3] : memref<3x32x32xf32, #tpu.memory_space<vmem>>, vector<1x32x32xf32>
    %3 = vector.shape_cast %2 : vector<1x32x32xf32> to vector<32x32xf32>
    %cst = arith.constant dense<0.000000e+00> : vector<8x32xf32>
    %4 = tpu.matmul %1, %3, %cst {dimension_numbers = #tpu.dot_dimension_numbers<[1], [0], [0], [1], [0, 0, 1, 1], [], []>} : vector<8x32xf32>, vector<32x32xf32>, vector<8x32xf32> -> vector<8x32xf32>
    %c0_4 = arith.constant 0 : index
    %c0_5 = arith.constant 0 : index
    %c0_6 = arith.constant 0 : index
    %5 = vector.load %arg3[%c0_4, %c0_5, %c0_6] : memref<2x8x8xf32, #tpu.memory_space<vmem>>, vector<1x8x8xf32>
    %6 = vector.shape_cast %5 : vector<1x8x8xf32> to vector<8x8xf32>
    %cst_7 = arith.constant dense<0.000000e+00> : vector<8x32xf32>
    %7 = tpu.matmul %6, %1, %cst_7 {dimension_numbers = #tpu.dot_dimension_numbers<[1], [0], [0], [1], [0, 0, 1, 1], [], []>} : vector<8x8xf32>, vector<8x32xf32>, vector<8x32xf32> -> vector<8x32xf32>
    %c0_8 = arith.constant 0 : index
    %c0_9 = arith.constant 0 : index
    %c0_10 = arith.constant 0 : index
    %8 = vector.load %arg2[%c0_8, %c0_9, %c0_10] : memref<3x32x32xf32, #tpu.memory_space<vmem>>, vector<1x32x32xf32>
    %9 = vector.shape_cast %8 : vector<1x32x32xf32> to vector<32x32xf32>
    %cst_11 = arith.constant dense<0.000000e+00> : vector<8x32xf32>
    %10 = tpu.matmul %7, %9, %cst_11 {dimension_numbers = #tpu.dot_dimension_numbers<[1], [0], [0], [1], [0, 0, 1, 1], [], []>} : vector<8x32xf32>, vector<32x32xf32>, vector<8x32xf32> -> vector<8x32xf32>
    %11 = arith.addf %4, %10 : vector<8x32xf32>
    %c1_12 = arith.constant 1 : index
    %c0_13 = arith.constant 0 : index
    %c0_14 = arith.constant 0 : index
    %12 = vector.load %arg3[%c1_12, %c0_13, %c0_14] : memref<2x8x8xf32, #tpu.memory_space<vmem>>, vector<1x8x8xf32>
    %13 = vector.shape_cast %12 : vector<1x8x8xf32> to vector<8x8xf32>
    %cst_15 = arith.constant dense<0.000000e+00> : vector<8x32xf32>
    %14 = tpu.matmul %13, %1, %cst_15 {dimension_numbers = #tpu.dot_dimension_numbers<[1], [0], [0], [1], [0, 0, 1, 1], [], []>} : vector<8x8xf32>, vector<8x32xf32>, vector<8x32xf32> -> vector<8x32xf32>
    %c2 = arith.constant 2 : index
    %c0_16 = arith.constant 0 : index
    %c0_17 = arith.constant 0 : index
    %15 = vector.load %arg2[%c2, %c0_16, %c0_17] : memref<3x32x32xf32, #tpu.memory_space<vmem>>, vector<1x32x32xf32>
    %16 = vector.shape_cast %15 : vector<1x32x32xf32> to vector<32x32xf32>
    %cst_18 = arith.constant dense<0.000000e+00> : vector<8x32xf32>
    %17 = tpu.matmul %14, %16, %cst_18 {dimension_numbers = #tpu.dot_dimension_numbers<[1], [0], [0], [1], [0, 0, 1, 1], [], []>} : vector<8x32xf32>, vector<32x32xf32>, vector<8x32xf32> -> vector<8x32xf32>
    %18 = arith.addf %11, %17 : vector<8x32xf32>
    %c0_19 = arith.constant 0 : index
    %c0_20 = arith.constant 0 : index
    %19 = vector.load %arg4[%c0_19, %c0_20] : memref<1x32xf32, #tpu.memory_space<vmem>>, vector<1x32xf32>
    %20 = vector.broadcast %19 : vector<1x32xf32> to vector<8x32xf32>
    %21 = arith.addf %18, %20 : vector<8x32xf32>
    %cst_21 = arith.constant 0.000000e+00 : f32
    %22 = vector.broadcast %cst_21 : f32 to vector<8x32xf32>
    %23 = arith.maximumf %21, %22 : vector<8x32xf32>
    %c0_22 = arith.constant 0 : index
    %c0_23 = arith.constant 0 : index
    %24 = vector.load %arg5[%c0_22, %c0_23] : memref<16x8xf32, #tpu.memory_space<vmem>>, vector<16x8xf32>
    %cst_24 = arith.constant dense<0.000000e+00> : vector<16x32xf32>
    %25 = tpu.matmul %24, %23, %cst_24 {dimension_numbers = #tpu.dot_dimension_numbers<[1], [0], [0], [1], [0, 0, 1, 1], [], []>} : vector<16x8xf32>, vector<8x32xf32>, vector<16x32xf32> -> vector<16x32xf32>
    %c0_25 = arith.constant 0 : index
    %c0_26 = arith.constant 0 : index
    %26 = vector.load %arg6[%c0_25, %c0_26] : memref<32x64xf32, #tpu.memory_space<vmem>>, vector<32x64xf32>
    %cst_27 = arith.constant dense<0.000000e+00> : vector<16x64xf32>
    %27 = tpu.matmul %25, %26, %cst_27 {dimension_numbers = #tpu.dot_dimension_numbers<[1], [0], [0], [1], [0, 0, 1, 1], [], []>} : vector<16x32xf32>, vector<32x64xf32>, vector<16x64xf32> -> vector<16x64xf32>
    %c0_28 = arith.constant 0 : index
    %c0_29 = arith.constant 0 : index
    %c0_30 = arith.constant 0 : index
    %28 = vector.load %arg7[%c0_28, %c0_29, %c0_30] : memref<1x16x64xf32, #tpu.memory_space<vmem>>, vector<1x16x64xf32>
    %29 = vector.shape_cast %28 : vector<1x16x64xf32> to vector<16x64xf32>
    %30 = arith.addf %27, %29 : vector<16x64xf32>
    %c0_31 = arith.constant 0 : index
    %c0_32 = arith.constant 0 : index
    %c0_33 = arith.constant 0 : index
    %31 = vector.load %arg8[%c0_31, %c0_32, %c0_33] : memref<1x16x64xf32, #tpu.memory_space<vmem>>, vector<1x16x64xf32>
    %32 = vector.shape_cast %31 : vector<1x16x64xf32> to vector<16x64xf32>
    %33 = vector.shape_cast %30 : vector<16x64xf32> to vector<1x16x64xf32>
    tpu.vector_store %arg8[%c0_31, %c0_32, %c0_33], %33 {strides = array<i32>} : memref<1x16x64xf32, #tpu.memory_space<vmem>>, vector<1x16x64xf32>,
    return
  }
  func.func @transform_0(%arg0: i32) -> (i32, i32, i32) {
    %c0_i32 = arith.constant 0 : i32
    %c0_i32_0 = arith.constant 0 : i32
    %c0_i32_1 = arith.constant 0 : i32
    return %arg0, %c0_i32, %c0_i32_0 : i32, i32, i32
  }
  func.func @transform_1(%arg0: i32) -> (i32, i32, i32) {
    %c0_i32 = arith.constant 0 : i32
    %c0_i32_0 = arith.constant 0 : i32
    %c0_i32_1 = arith.constant 0 : i32
    %c0_i32_2 = arith.constant 0 : i32
    return %c0_i32, %c0_i32_0, %c0_i32_1 : i32, i32, i32
  }
  func.func @transform_2(%arg0: i32) -> (i32, i32, i32) {
    %c0_i32 = arith.constant 0 : i32
    %c0_i32_0 = arith.constant 0 : i32
    %c0_i32_1 = arith.constant 0 : i32
    %c0_i32_2 = arith.constant 0 : i32
    return %c0_i32, %c0_i32_0, %c0_i32_1 : i32, i32, i32
  }
  func.func @transform_3(%arg0: i32) -> (i32, i32) {
    %c0_i32 = arith.constant 0 : i32
    %c0_i32_0 = arith.constant 0 : i32
    %c0_i32_1 = arith.constant 0 : i32
    return %c0_i32, %c0_i32_0 : i32, i32
  }
  func.func @transform_4(%arg0: i32) -> (i32, i32) {
    %c0_i32 = arith.constant 0 : i32
    %c0_i32_0 = arith.constant 0 : i32
    %c0_i32_1 = arith.constant 0 : i32
    return %c0_i32, %c0_i32_0 : i32, i32
  }
  func.func @transform_5(%arg0: i32) -> (i32, i32) {
    %c0_i32 = arith.constant 0 : i32
    %c0_i32_0 = arith.constant 0 : i32
    %c0_i32_1 = arith.constant 0 : i32
    return %c0_i32, %c0_i32_0 : i32, i32
  }
  func.func @transform_6(%arg0: i32) -> (i32, i32, i32) {
    %c0_i32 = arith.constant 0 : i32
    %c0_i32_0 = arith.constant 0 : i32
    %c0_i32_1 = arith.constant 0 : i32
    return %arg0, %c0_i32, %c0_i32_0 : i32, i32, i32
  }
  func.func @transform_7(%arg0: i32) -> (i32, i32, i32) {
    %c0_i32 = arith.constant 0 : i32
    %c0_i32_0 = arith.constant 0 : i32
    %c0_i32_1 = arith.constant 0 : i32
    return %arg0, %c0_i32, %c0_i32_0 : i32, i32, i32
  }
}

module attributes {stable_mosaic.version = 11 : i64} {
  func.func @_fpn_level_kernel(%arg0: i32, %arg1: memref<1x16x64xf32, #tpu.memory_space<vmem>>, %arg2: memref<3x64x64xf32, #tpu.memory_space<vmem>>, %arg3: memref<2x16x16xf32, #tpu.memory_space<vmem>>, %arg4: memref<1x64xf32, #tpu.memory_space<vmem>>, %arg5: memref<32x16xf32, #tpu.memory_space<vmem>>, %arg6: memref<64x128xf32, #tpu.memory_space<vmem>>, %arg7: memref<1x32x128xf32, #tpu.memory_space<vmem>>, %arg8: memref<1x32x128xf32, #tpu.memory_space<vmem>>) attributes {dimension_semantics = [#tpu.dimension_semantics<parallel>], iteration_bounds = array<i64: 2>, scalar_prefetch = 0 : i64, scratch_operands = 0 : i64, tpu.core_type = #tpu.core_type<tc>, window_params = [{transform_indices = @transform_0, window_bounds = array<i64: 1, 16, 64>}, {pipeline_mode = #tpu.pipeline_mode<synchronous>, transform_indices = @transform_1, window_bounds = array<i64: 3, 64, 64>}, {pipeline_mode = #tpu.pipeline_mode<synchronous>, transform_indices = @transform_2, window_bounds = array<i64: 2, 16, 16>}, {pipeline_mode = #tpu.pipeline_mode<synchronous>, transform_indices = @transform_3, window_bounds = array<i64: 1, 64>}, {pipeline_mode = #tpu.pipeline_mode<synchronous>, transform_indices = @transform_4, window_bounds = array<i64: 32, 16>}, {pipeline_mode = #tpu.pipeline_mode<synchronous>, transform_indices = @transform_5, window_bounds = array<i64: 64, 128>}, {transform_indices = @transform_6, window_bounds = array<i64: 1, 32, 128>}, {transform_indices = @transform_7, window_bounds = array<i64: 1, 32, 128>}]} {
    %c0 = arith.constant 0 : index
    %c0_0 = arith.constant 0 : index
    %c0_1 = arith.constant 0 : index
    %0 = vector.load %arg1[%c0, %c0_0, %c0_1] : memref<1x16x64xf32, #tpu.memory_space<vmem>>, vector<1x16x64xf32>
    %1 = vector.shape_cast %0 : vector<1x16x64xf32> to vector<16x64xf32>
    %c1 = arith.constant 1 : index
    %c0_2 = arith.constant 0 : index
    %c0_3 = arith.constant 0 : index
    %2 = vector.load %arg2[%c1, %c0_2, %c0_3] : memref<3x64x64xf32, #tpu.memory_space<vmem>>, vector<1x64x64xf32>
    %3 = vector.shape_cast %2 : vector<1x64x64xf32> to vector<64x64xf32>
    %cst = arith.constant dense<0.000000e+00> : vector<16x64xf32>
    %4 = tpu.matmul %1, %3, %cst {dimension_numbers = #tpu.dot_dimension_numbers<[1], [0], [0], [1], [0, 0, 1, 1], [], []>} : vector<16x64xf32>, vector<64x64xf32>, vector<16x64xf32> -> vector<16x64xf32>
    %c0_4 = arith.constant 0 : index
    %c0_5 = arith.constant 0 : index
    %c0_6 = arith.constant 0 : index
    %5 = vector.load %arg3[%c0_4, %c0_5, %c0_6] : memref<2x16x16xf32, #tpu.memory_space<vmem>>, vector<1x16x16xf32>
    %6 = vector.shape_cast %5 : vector<1x16x16xf32> to vector<16x16xf32>
    %cst_7 = arith.constant dense<0.000000e+00> : vector<16x64xf32>
    %7 = tpu.matmul %6, %1, %cst_7 {dimension_numbers = #tpu.dot_dimension_numbers<[1], [0], [0], [1], [0, 0, 1, 1], [], []>} : vector<16x16xf32>, vector<16x64xf32>, vector<16x64xf32> -> vector<16x64xf32>
    %c0_8 = arith.constant 0 : index
    %c0_9 = arith.constant 0 : index
    %c0_10 = arith.constant 0 : index
    %8 = vector.load %arg2[%c0_8, %c0_9, %c0_10] : memref<3x64x64xf32, #tpu.memory_space<vmem>>, vector<1x64x64xf32>
    %9 = vector.shape_cast %8 : vector<1x64x64xf32> to vector<64x64xf32>
    %cst_11 = arith.constant dense<0.000000e+00> : vector<16x64xf32>
    %10 = tpu.matmul %7, %9, %cst_11 {dimension_numbers = #tpu.dot_dimension_numbers<[1], [0], [0], [1], [0, 0, 1, 1], [], []>} : vector<16x64xf32>, vector<64x64xf32>, vector<16x64xf32> -> vector<16x64xf32>
    %11 = arith.addf %4, %10 : vector<16x64xf32>
    %c1_12 = arith.constant 1 : index
    %c0_13 = arith.constant 0 : index
    %c0_14 = arith.constant 0 : index
    %12 = vector.load %arg3[%c1_12, %c0_13, %c0_14] : memref<2x16x16xf32, #tpu.memory_space<vmem>>, vector<1x16x16xf32>
    %13 = vector.shape_cast %12 : vector<1x16x16xf32> to vector<16x16xf32>
    %cst_15 = arith.constant dense<0.000000e+00> : vector<16x64xf32>
    %14 = tpu.matmul %13, %1, %cst_15 {dimension_numbers = #tpu.dot_dimension_numbers<[1], [0], [0], [1], [0, 0, 1, 1], [], []>} : vector<16x16xf32>, vector<16x64xf32>, vector<16x64xf32> -> vector<16x64xf32>
    %c2 = arith.constant 2 : index
    %c0_16 = arith.constant 0 : index
    %c0_17 = arith.constant 0 : index
    %15 = vector.load %arg2[%c2, %c0_16, %c0_17] : memref<3x64x64xf32, #tpu.memory_space<vmem>>, vector<1x64x64xf32>
    %16 = vector.shape_cast %15 : vector<1x64x64xf32> to vector<64x64xf32>
    %cst_18 = arith.constant dense<0.000000e+00> : vector<16x64xf32>
    %17 = tpu.matmul %14, %16, %cst_18 {dimension_numbers = #tpu.dot_dimension_numbers<[1], [0], [0], [1], [0, 0, 1, 1], [], []>} : vector<16x64xf32>, vector<64x64xf32>, vector<16x64xf32> -> vector<16x64xf32>
    %18 = arith.addf %11, %17 : vector<16x64xf32>
    %c0_19 = arith.constant 0 : index
    %c0_20 = arith.constant 0 : index
    %19 = vector.load %arg4[%c0_19, %c0_20] : memref<1x64xf32, #tpu.memory_space<vmem>>, vector<1x64xf32>
    %20 = vector.broadcast %19 : vector<1x64xf32> to vector<16x64xf32>
    %21 = arith.addf %18, %20 : vector<16x64xf32>
    %cst_21 = arith.constant 0.000000e+00 : f32
    %22 = vector.broadcast %cst_21 : f32 to vector<16x64xf32>
    %23 = arith.maximumf %21, %22 : vector<16x64xf32>
    %c0_22 = arith.constant 0 : index
    %c0_23 = arith.constant 0 : index
    %24 = vector.load %arg5[%c0_22, %c0_23] : memref<32x16xf32, #tpu.memory_space<vmem>>, vector<32x16xf32>
    %cst_24 = arith.constant dense<0.000000e+00> : vector<32x64xf32>
    %25 = tpu.matmul %24, %23, %cst_24 {dimension_numbers = #tpu.dot_dimension_numbers<[1], [0], [0], [1], [0, 0, 1, 1], [], []>} : vector<32x16xf32>, vector<16x64xf32>, vector<32x64xf32> -> vector<32x64xf32>
    %c0_25 = arith.constant 0 : index
    %c0_26 = arith.constant 0 : index
    %26 = vector.load %arg6[%c0_25, %c0_26] : memref<64x128xf32, #tpu.memory_space<vmem>>, vector<64x128xf32>
    %cst_27 = arith.constant dense<0.000000e+00> : vector<32x128xf32>
    %27 = tpu.matmul %25, %26, %cst_27 {dimension_numbers = #tpu.dot_dimension_numbers<[1], [0], [0], [1], [0, 0, 1, 1], [], []>} : vector<32x64xf32>, vector<64x128xf32>, vector<32x128xf32> -> vector<32x128xf32>
    %c0_28 = arith.constant 0 : index
    %c0_29 = arith.constant 0 : index
    %c0_30 = arith.constant 0 : index
    %28 = vector.load %arg7[%c0_28, %c0_29, %c0_30] : memref<1x32x128xf32, #tpu.memory_space<vmem>>, vector<1x32x128xf32>
    %29 = vector.shape_cast %28 : vector<1x32x128xf32> to vector<32x128xf32>
    %30 = arith.addf %27, %29 : vector<32x128xf32>
    %c0_31 = arith.constant 0 : index
    %c0_32 = arith.constant 0 : index
    %c0_33 = arith.constant 0 : index
    %31 = vector.load %arg8[%c0_31, %c0_32, %c0_33] : memref<1x32x128xf32, #tpu.memory_space<vmem>>, vector<1x32x128xf32>
    %32 = vector.shape_cast %31 : vector<1x32x128xf32> to vector<32x128xf32>
    %33 = vector.shape_cast %30 : vector<32x128xf32> to vector<1x32x128xf32>
    tpu.vector_store %arg8[%c0_31, %c0_32, %c0_33], %33 {strides = array<i32>} : memref<1x32x128xf32, #tpu.memory_space<vmem>>, vector<1x32x128xf32>,
    return
  }
  func.func @transform_0(%arg0: i32) -> (i32, i32, i32) {
    %c0_i32 = arith.constant 0 : i32
    %c0_i32_0 = arith.constant 0 : i32
    %c0_i32_1 = arith.constant 0 : i32
    return %arg0, %c0_i32, %c0_i32_0 : i32, i32, i32
  }
  func.func @transform_1(%arg0: i32) -> (i32, i32, i32) {
    %c0_i32 = arith.constant 0 : i32
    %c0_i32_0 = arith.constant 0 : i32
    %c0_i32_1 = arith.constant 0 : i32
    %c0_i32_2 = arith.constant 0 : i32
    return %c0_i32, %c0_i32_0, %c0_i32_1 : i32, i32, i32
  }
  func.func @transform_2(%arg0: i32) -> (i32, i32, i32) {
    %c0_i32 = arith.constant 0 : i32
    %c0_i32_0 = arith.constant 0 : i32
    %c0_i32_1 = arith.constant 0 : i32
    %c0_i32_2 = arith.constant 0 : i32
    return %c0_i32, %c0_i32_0, %c0_i32_1 : i32, i32, i32
  }
  func.func @transform_3(%arg0: i32) -> (i32, i32) {
    %c0_i32 = arith.constant 0 : i32
    %c0_i32_0 = arith.constant 0 : i32
    %c0_i32_1 = arith.constant 0 : i32
    return %c0_i32, %c0_i32_0 : i32, i32
  }
  func.func @transform_4(%arg0: i32) -> (i32, i32) {
    %c0_i32 = arith.constant 0 : i32
    %c0_i32_0 = arith.constant 0 : i32
    %c0_i32_1 = arith.constant 0 : i32
    return %c0_i32, %c0_i32_0 : i32, i32
  }
  func.func @transform_5(%arg0: i32) -> (i32, i32) {
    %c0_i32 = arith.constant 0 : i32
    %c0_i32_0 = arith.constant 0 : i32
    %c0_i32_1 = arith.constant 0 : i32
    return %c0_i32, %c0_i32_0 : i32, i32
  }
  func.func @transform_6(%arg0: i32) -> (i32, i32, i32) {
    %c0_i32 = arith.constant 0 : i32
    %c0_i32_0 = arith.constant 0 : i32
    %c0_i32_1 = arith.constant 0 : i32
    return %arg0, %c0_i32, %c0_i32_0 : i32, i32, i32
  }
  func.func @transform_7(%arg0: i32) -> (i32, i32, i32) {
    %c0_i32 = arith.constant 0 : i32
    %c0_i32_0 = arith.constant 0 : i32
    %c0_i32_1 = arith.constant 0 : i32
    return %arg0, %c0_i32, %c0_i32_0 : i32, i32, i32
  }
}

</mosaic_0001>

<llo_original>
// kernel: tile.18
$region0: #{tile.18}
  #allocation0 [shape = 's32[1]{0}', space=sflag, size = 0x4, scoped, tag = 'scoped memory for tile.18']
  %s0 = inlined_call_operand.vmem [shape: f32[4], index: 0, kind: input, shape index: {}]
  %s1 = inlined_call_operand.vmem [shape: f32[4,4], index: 1, kind: output, shape index: {}]
  // Predicated region
  $region2: #{tile.18} parent=0 // pred_check
    _
  $region3: #{tile.18} parent=0 // pred_check_branch
    %3 = sbr.rel (0) target = $region5
  $region4: #{tile.18} parent=0 // pred_region
    _
  $region5: #{tile.18} parent=0 // pred_fallthru
    _
  %v4 = vld [vmem:[%s0] ss:$0 sm:$0xff]
  %5 = vst [vmem:[%s1] sm:$0xf] %v4

// kernel: tile.19
$region0: #{tile.19}
  %s0 = inlined_call_operand.vmem [shape: f32[4,4], index: 0, kind: input, shape index: {}]
  %s1 = inlined_call_operand.vmem [shape: f32[1,16], index: 1, kind: output, shape index: {}]
  $region1: #{tile.19} parent=0
    #allocation0 [shape = 'u8[4096]{0}', space=vmem, size = 0x1000, scoped, tag = 'scoped mem for output reshape']
    #allocation1 [shape = 'u8[4096]{0}', space=vmem, size = 0x1000, scoped, tag = 'scoped mem for input reshape']
    %s3 = ssub.s32 16, 1
    %v4 = vld [vmem:[%s0] sm:%s3]
    %5 = vst [vmem:[#allocation1] sm:%s3] %v4
    %v6 = vld [vmem:[#allocation1] sm:$0x1]
    %vm7 = vcmask 31744
    %8 = vst.msk [vmem:[#allocation0] sm:$0x1] %vm7, %v6
    %s9 = scalar_lea.vmem [#allocation1], 3
    %v10 = vld [vmem:[%s9] sm:$0x1]
    %11 = vrot.lane.b32.xlu0 %v10, 12
    %v12 = vpop.permute.xlu0 %11
    %vm13 = vcmask 130144
    %14 = vst.msk [vmem:[#allocation0] sm:$0x1] %vm13, %v12
    %s15 = scalar_lea.vmem [#allocation1], 2
    %v16 = vld [vmem:[%s15] sm:$0x1]
    %17 = vrot.lane.b32.xlu0 %v16, 8
    %v18 = vpop.permute.xlu0 %17
    %vm19 = vcmask 97344
    %20 = vst.msk [vmem:[#allocation0] sm:$0x1] %vm19, %v18
    %s21 = scalar_lea.vmem [#allocation1], 1
    %v22 = vld [vmem:[%s21] sm:$0x1]
    %23 = vrot.lane.b32.xlu0 %v22, 4
    %v24 = vpop.permute.xlu0 %23
    %vm25 = vcmask 64544
    %26 = vst.msk [vmem:[#allocation0] sm:$0x1] %vm25, %v24
    %s28 = ssub.s32 2, 1
    %v29 = vld [vmem:[#allocation0] sm:%s28]
    %s31 = ssub.s32 2, 1
    %32 = vst [vmem:[%s1] sm:%s31] %v29

// kernel: tile.23
$region0: #{tile.23}
  #allocation0 [shape = 's32[1]{0}', space=sflag, size = 0x4, scoped, tag = 'scoped memory for tile.23']
  %s0 = inlined_call_operand.vmem [shape: f32[4], index: 0, kind: input, shape index: {}]
  %s1 = inlined_call_operand.vmem [shape: f32[8,4], index: 1, kind: output, shape index: {}]
  // Predicated region
  $region2: #{tile.23} parent=0 // pred_check
    _
  $region3: #{tile.23} parent=0 // pred_check_branch
    %3 = sbr.rel (0) target = $region5
  $region4: #{tile.23} parent=0 // pred_region
    _
  $region5: #{tile.23} parent=0 // pred_fallthru
    _
  %v4 = vld [vmem:[%s0] ss:$0 sm:$0xff]
  %5 = vst [vmem:[%s1] sm:$0xff] %v4

// kernel: tile.24
$region0: #{tile.24}
  %s0 = inlined_call_operand.vmem [shape: f32[8,4], index: 0, kind: input, shape index: {}]
  %s1 = inlined_call_operand.vmem [shape: f32[1,32], index: 1, kind: output, shape index: {}]
  $region1: #{tile.24} parent=0
    #allocation0 [shape = 'u8[4096]{0}', space=vmem, size = 0x1000, scoped, tag = 'scoped mem for output reshape']
    %v2 = vld [vmem:[%s0] sm:$0x1]
    %vm3 = vcmask 31744
    %4 = vst.msk [vmem:[#allocation0] sm:$0x1] %vm3, %v2
    %s5 = scalar_lea.vmem %s0, 7
    %v6 = vld [vmem:[%s5] sm:$0x1]
    %7 = vrot.lane.b32.xlu0 %v6, 28
    %v8 = vpop.permute.xlu0 %7
    %vm9 = vcmask 261344
    %10 = vst.msk [vmem:[#allocation0] sm:$0x1] %vm9, %v8
    %s11 = scalar_lea.vmem %s0, 6
    %v12 = vld [vmem:[%s11] sm:$0x1]
    %13 = vrot.lane.b32.xlu0 %v12, 24
    %v14 = vpop.permute.xlu0 %13
    %vm15 = vcmask 228544
    %16 = vst.msk [vmem:[#allocation0] sm:$0x1] %vm15, %v14
    %s17 = scalar_lea.vmem %s0, 5
    %v18 = vld [vmem:[%s17] sm:$0x1]
    %19 = vrot.lane.b32.xlu0 %v18, 20
    %v20 = vpop.permute.xlu0 %19
    %vm21 = vcmask 195744
    %22 = vst.msk [vmem:[#allocation0] sm:$0x1] %vm21, %v20
    %s23 = scalar_lea.vmem %s0, 4
    %v24 = vld [vmem:[%s23] sm:$0x1]
    %25 = vrot.lane.b32.xlu0 %v24, 16
    %v26 = vpop.permute.xlu0 %25
    %vm27 = vcmask 162944
    %28 = vst.msk [vmem:[#allocation0] sm:$0x1] %vm27, %v26
    %s29 = scalar_lea.vmem %s0, 3
    %v30 = vld [vmem:[%s29] sm:$0x1]
    %31 = vrot.lane.b32.xlu0 %v30, 12
    %v32 = vpop.permute.xlu0 %31
    %vm33 = vcmask 130144
    %34 = vst.msk [vmem:[#allocation0] sm:$0x1] %vm33, %v32
    %s35 = scalar_lea.vmem %s0, 2
    %v36 = vld [vmem:[%s35] sm:$0x1]
    %37 = vrot.lane.b32.xlu0 %v36, 8
    %v38 = vpop.permute.xlu0 %37
    %vm39 = vcmask 97344
    %40 = vst.msk [vmem:[#allocation0] sm:$0x1] %vm39, %v38
    %s41 = scalar_lea.vmem %s0, 1
    %v42 = vld [vmem:[%s41] sm:$0x1]
    %43 = vrot.lane.b32.xlu0 %v42, 4
    %v44 = vpop.permute.xlu0 %43
    %vm45 = vcmask 64544
    %46 = vst.msk [vmem:[#allocation0] sm:$0x1] %vm45, %v44
    %s48 = ssub.s32 2, 1
    %v49 = vld [vmem:[#allocation0] sm:%s48]
    %s51 = ssub.s32 2, 1
    %52 = vst [vmem:[%s1] sm:%s51] %v49

// kernel: fpn_forward.3
$region0: #{fpn_forward.3}
  #allocation0 [shape = 'u32[]', space=smem, size = 0x4, offset = 0x4, fixed_abs, tag = 'smem constant byte address 0x4 - core index']
  #allocation1 [shape = 'u32[72,128]{1,0:T(1,128)}', space=vmem, size = 0x9000, scoped, tag = 'internal scratch']
  %s0 = inlined_call_operand.vmem [shape: f32[2,4,16], index: 0, kind: input, shape index: {}]
  %s1 = inlined_call_operand.vmem [shape: f32[3,16,16], index: 1, kind: input, shape index: {}]
  %s2 = inlined_call_operand.vmem [shape: f32[2,4,4], index: 2, kind: input, shape index: {}]
  %s3 = inlined_call_operand.vmem [shape: f32[1,16], index: 3, kind: input, shape index: {}]
  %s4 = inlined_call_operand.vmem [shape: f32[8,4], index: 4, kind: input, shape index: {}]
  %s5 = inlined_call_operand.vmem [shape: f32[16,32], index: 5, kind: input, shape index: {}]
  %s6 = inlined_call_operand.vmem [shape: f32[2,8,32], index: 6, kind: input, shape index: {}]
  %s7 = inlined_call_operand.vmem [shape: f32[2,8,32], index: 7, kind: output, shape index: {}]
  %s8 = sld [smem:[#allocation0]]
  $region61: #{fpn_forward.3} parent=0
    _
  %s10 = ssub.s32 1, %s8
  %s11 = scalar_select 0, %s10, %s8
  loop: start=0, step=1, limit=4
  $region2: #{fpn_forward.3} parent=0 // loop_pre_header
    _
  $region3: #{fpn_forward.3} parent=0 // loop_header
    %s13 = sphi 0, %s17
    %p14 = scmp.ge.s32.totalorder %s13, 4
    %s23 = sphi 0, %s25
    %s26 = sphi 0, %s23
    %s27 = sphi 0, %s26
    %s43 = sphi 0, %s27
    %s47 = sphi 0, %s47
    %s49 = sphi 0, %s47
    %s50 = sphi 0, %s49
    %s64 = sphi 0, %s50
    %s68 = sphi 0, %s68
    %s70 = sphi 0, %s68
    %s71 = sphi 0, %s70
    %s85 = sphi 0, %s71
    %s89 = sphi 0, %s89
    %s91 = sphi 0, %s89
    %s92 = sphi 0, %s91
    %s106 = sphi 0, %s92
    %s110 = sphi 0, %s110
    %s112 = sphi 0, %s110
    %s113 = sphi 0, %s112
    %s127 = sphi 0, %s113
    %s131 = sphi 0, %s131
    %s133 = sphi 0, %s131
    %s134 = sphi 0, %s133
    %s148 = sphi 0, %s134
    %s154 = sphi 0, %s156
    %s157 = sphi 0, %s154
    %s158 = sphi 0, %s157
    %s174 = sphi 0, %s158
    %s180 = sphi 0, %s182
    %s183 = sphi 0, %s180
    %s184 = sphi 0, %s183
    %s200 = sphi 0, %s184
  $region4: #{fpn_forward.3} parent=0 // loop_header_branch
    %16 = sbr.rel (%p14) target = $region8
  $region5: #{fpn_forward.3} parent=0 // loop_body
    %s18 = ssub.s32 %s13, 1
    %s19 = ssub.s32 %s13, 2
    %s20 = sadd.s32 %s13, 1
    %s21 = ssub.s32 %s13, %s20
    %p22 = scmp.eq.s32.totalorder %s21, 0
    %s24 = sadd.s32 %s23, 1
    %s25 = scalar_select %p22, %s23, %s24
    %p28 = pneg %p22
    %p29 = scmp.eq.s32.totalorder %s13, 1
    %p30 = por %p28, %p29
    %p31 = scmp.ne.s32.totalorder %s23, %s26
    %p32 = scmp.eq.s32.totalorder %s13, 0
    %p33 = por %p31, %p32
    %p34 = scmp.ne.s32.totalorder %s23, %s26
    %p35 = scmp.eq.s32.totalorder %s18, 1
    %p36 = por %p34, %p35
    %p37 = scmp.ne.s32.totalorder %s26, %s27
    %p38 = scmp.eq.s32.totalorder %s18, 0
    %p39 = por %p37, %p38
    %p40 = scmp.ne.s32.totalorder %s26, %s27
    %p41 = scmp.eq.s32.totalorder %s19, 1
    %p42 = por %p40, %p41
    %p44 = scmp.ne.s32.totalorder %s27, %s43
    %p45 = scmp.eq.s32.totalorder %s19, 0
    %p46 = por %p44, %p45
    %s48 = sadd.s32 %s47, 1
    %p51 = scmp.eq.s32.totalorder %s13, 1
    %p52 = scmp.ne.s32.totalorder %s47, %s49
    %p53 = scmp.eq.s32.totalorder %s13, 0
    %p54 = por %p52, %p53
    %p55 = scmp.ne.s32.totalorder %s47, %s49
    %p56 = scmp.eq.s32.totalorder %s18, 1
    %p57 = por %p55, %p56
    %p58 = scmp.ne.s32.totalorder %s49, %s50
    %p59 = scmp.eq.s32.totalorder %s18, 0
    %p60 = por %p58, %p59
    %p61 = scmp.ne.s32.totalorder %s49, %s50
    %p62 = scmp.eq.s32.totalorder %s19, 1
    %p63 = por %p61, %p62
    %p65 = scmp.ne.s32.totalorder %s50, %s64
    %p66 = scmp.eq.s32.totalorder %s19, 0
    %p67 = por %p65, %p66
    %s69 = sadd.s32 %s68, 1
    %p72 = scmp.eq.s32.totalorder %s13, 1
    %p73 = scmp.ne.s32.totalorder %s68, %s70
    %p74 = scmp.eq.s32.totalorder %s13, 0
    %p75 = por %p73, %p74
    %p76 = scmp.ne.s32.totalorder %s68, %s70
    %p77 = scmp.eq.s32.totalorder %s18, 1
    %p78 = por %p76, %p77
    %p79 = scmp.ne.s32.totalorder %s70, %s71
    %p80 = scmp.eq.s32.totalorder %s18, 0
    %p81 = por %p79, %p80
    %p82 = scmp.ne.s32.totalorder %s70, %s71
    %p83 = scmp.eq.s32.totalorder %s19, 1
    %p84 = por %p82, %p83
    %p86 = scmp.ne.s32.totalorder %s71, %s85
    %p87 = scmp.eq.s32.totalorder %s19, 0
    %p88 = por %p86, %p87
    %s90 = sadd.s32 %s89, 1
    %p93 = scmp.eq.s32.totalorder %s13, 1
    %p94 = scmp.ne.s32.totalorder %s89, %s91
    %p95 = scmp.eq.s32.totalorder %s13, 0
    %p96 = por %p94, %p95
    %p97 = scmp.ne.s32.totalorder %s89, %s91
    %p98 = scmp.eq.s32.totalorder %s18, 1
    %p99 = por %p97, %p98
    %p100 = scmp.ne.s32.totalorder %s91, %s92
    %p101 = scmp.eq.s32.totalorder %s18, 0
    %p102 = por %p100, %p101
    %p103 = scmp.ne.s32.totalorder %s91, %s92
    %p104 = scmp.eq.s32.totalorder %s19, 1
    %p105 = por %p103, %p104
    %p107 = scmp.ne.s32.totalorder %s92, %s106
    %p108 = scmp.eq.s32.totalorder %s19, 0
    %p109 = por %p107, %p108
    %s111 = sadd.s32 %s110, 1
    %p114 = scmp.eq.s32.totalorder %s13, 1
    %p115 = scmp.ne.s32.totalorder %s110, %s112
    %p116 = scmp.eq.s32.totalorder %s13, 0
    %p117 = por %p115, %p116
    %p118 = scmp.ne.s32.totalorder %s110, %s112
    %p119 = scmp.eq.s32.totalorder %s18, 1
    %p120 = por %p118, %p119
    %p121 = scmp.ne.s32.totalorder %s112, %s113
    %p122 = scmp.eq.s32.totalorder %s18, 0
    %p123 = por %p121, %p122
    %p124 = scmp.ne.s32.totalorder %s112, %s113
    %p125 = scmp.eq.s32.totalorder %s19, 1
    %p126 = por %p124, %p125
    %p128 = scmp.ne.s32.totalorder %s113, %s127
    %p129 = scmp.eq.s32.totalorder %s19, 0
    %p130 = por %p128, %p129
    %s132 = sadd.s32 %s131, 1
    %p135 = scmp.eq.s32.totalorder %s13, 1
    %p136 = scmp.ne.s32.totalorder %s131, %s133
    %p137 = scmp.eq.s32.totalorder %s13, 0
    %p138 = por %p136, %p137
    %p139 = scmp.ne.s32.totalorder %s131, %s133
    %p140 = scmp.eq.s32.totalorder %s18, 1
    %p141 = por %p139, %p140
    %p142 = scmp.ne.s32.totalorder %s133, %s134
    %p143 = scmp.eq.s32.totalorder %s18, 0
    %p144 = por %p142, %p143
    %p145 = scmp.ne.s32.totalorder %s133, %s134
    %p146 = scmp.eq.s32.totalorder %s19, 1
    %p147 = por %p145, %p146
    %p149 = scmp.ne.s32.totalorder %s134, %s148
    %p150 = scmp.eq.s32.totalorder %s19, 0
    %p151 = por %p149, %p150
    %s152 = ssub.s32 %s13, %s20
    %p153 = scmp.eq.s32.totalorder %s152, 0
    %s155 = sadd.s32 %s154, 1
    %s156 = scalar_select %p153, %s154, %s155
    %p159 = pneg %p153
    %p160 = scmp.eq.s32.totalorder %s13, 1
    %p161 = por %p159, %p160
    %p162 = scmp.ne.s32.totalorder %s154, %s157
    %p163 = scmp.eq.s32.totalorder %s13, 0
    %p164 = por %p162, %p163
    %p165 = scmp.ne.s32.totalorder %s154, %s157
    %p166 = scmp.eq.s32.totalorder %s18, 1
    %p167 = por %p165, %p166
    %p168 = scmp.ne.s32.totalorder %s157, %s158
    %p169 = scmp.eq.s32.totalorder %s18, 0
    %p170 = por %p168, %p169
    %p171 = scmp.ne.s32.totalorder %s157, %s158
    %p172 = scmp.eq.s32.totalorder %s19, 1
    %p173 = por %p171, %p172
    %p175 = scmp.ne.s32.totalorder %s158, %s174
    %p176 = scmp.eq.s32.totalorder %s19, 0
    %p177 = por %p175, %p176
    %s178 = ssub.s32 %s13, %s20
    %p179 = scmp.eq.s32.totalorder %s178, 0
    %s181 = sadd.s32 %s180, 1
    %s182 = scalar_select %p179, %s180, %s181
    %p185 = pneg %p179
    %p186 = scmp.eq.s32.totalorder %s13, 1
    %p187 = por %p185, %p186
    %p188 = scmp.ne.s32.totalorder %s180, %s183
    %p189 = scmp.eq.s32.totalorder %s13, 0
    %p190 = por %p188, %p189
    %p191 = scmp.ne.s32.totalorder %s180, %s183
    %p192 = scmp.eq.s32.totalorder %s18, 1
    %p193 = por %p191, %p192
    %p194 = scmp.ne.s32.totalorder %s183, %s184
    %p195 = scmp.eq.s32.totalorder %s18, 0
    %p196 = por %p194, %p195
    %p197 = scmp.ne.s32.totalorder %s183, %s184
    %p198 = scmp.eq.s32.totalorder %s19, 1
    %p199 = por %p197, %p198
    %p201 = scmp.ne.s32.totalorder %s184, %s200
    %p202 = scmp.eq.s32.totalorder %s19, 0
    %p203 = por %p201, %p202
    %p204 = scmp.le.s32.totalorder 1, %s13
    %p205 = scmp.lt.s32.totalorder %s13, 3
    %p206 = pnand %p204, %p205
    %p207 = pneg %p206
    // Predicated region
    $region9: #{fpn_forward.3} parent=5 // pred_check
      _
    $region10: #{fpn_forward.3} parent=5 // pred_check_branch
      %209 = sbr.rel (%p206) target = $region12
    $region11: #{fpn_forward.3} parent=5 // pred_region
      %s210 = ssub.s32 %s13, 1
      // Predicated region
      $region13: #{fpn_forward.3} parent=11 // pred_check
        %p211 = pneg %p60
      $region14: #{fpn_forward.3} parent=11 // pred_check_branch
        %213 = sbr.rel (%p211) target = $region16
      $region15: #{fpn_forward.3} parent=11 // pred_region
        _
      $region16: #{fpn_forward.3} parent=11 // pred_fallthru
        _
      // Predicated region
      $region17: #{fpn_forward.3} parent=11 // pred_check
        %p214 = pneg %p81
      $region18: #{fpn_forward.3} parent=11 // pred_check_branch
        %216 = sbr.rel (%p214) target = $region20
      $region19: #{fpn_forward.3} parent=11 // pred_region
        _
      $region20: #{fpn_forward.3} parent=11 // pred_fallthru
        _
      // Predicated region
      $region21: #{fpn_forward.3} parent=11 // pred_check
        %p217 = pneg %p102
      $region22: #{fpn_forward.3} parent=11 // pred_check_branch
        %219 = sbr.rel (%p217) target = $region24
      $region23: #{fpn_forward.3} parent=11 // pred_region
        _
      $region24: #{fpn_forward.3} parent=11 // pred_fallthru
        _
      // Predicated region
      $region25: #{fpn_forward.3} parent=11 // pred_check
        %p220 = pneg %p123
      $region26: #{fpn_forward.3} parent=11 // pred_check_branch
        %222 = sbr.rel (%p220) target = $region28
      $region27: #{fpn_forward.3} parent=11 // pred_region
        _
      $region28: #{fpn_forward.3} parent=11 // pred_fallthru
        _
      // Predicated region
      $region29: #{fpn_forward.3} parent=11 // pred_check
        %p223 = pneg %p144
      $region30: #{fpn_forward.3} parent=11 // pred_check_branch
        %225 = sbr.rel (%p223) target = $region32
      $region31: #{fpn_forward.3} parent=11 // pred_region
        _
      $region32: #{fpn_forward.3} parent=11 // pred_fallthru
        _
    $region12: #{fpn_forward.3} parent=5 // pred_fallthru
      _
    %p226 = scmp.lt.s32.totalorder %s13, 2
    // Predicated region
    $region33: #{fpn_forward.3} parent=5 // pred_check
      %p227 = pneg %p226
    $region34: #{fpn_forward.3} parent=5 // pred_check_branch
      %229 = sbr.rel (%p227) target = $region36
    $region35: #{fpn_forward.3} parent=5 // pred_region
      // Predicated region
      $region37: #{fpn_forward.3} parent=35 // pred_check
        %p230 = pneg %p33
      $region38: #{fpn_forward.3} parent=35 // pred_check_branch
        %232 = sbr.rel (%p230) target = $region40
      $region39: #{fpn_forward.3} parent=35 // pred_region
        %p233 = scmp.lt.s32.totalorder %s13, 1
        %s234 = scalar_select %p233, %s13, 1
        %s235 = smul.addr %s234, 4
        %s236 = scalar_lea.vmem %s0, %s235
      $region40: #{fpn_forward.3} parent=35 // pred_fallthru
        _
      // Predicated region
      $region41: #{fpn_forward.3} parent=35 // pred_check
        %p237 = pneg %p164
      $region42: #{fpn_forward.3} parent=35 // pred_check_branch
        %239 = sbr.rel (%p237) target = $region44
      $region43: #{fpn_forward.3} parent=35 // pred_region
        %p240 = scmp.lt.s32.totalorder %s13, 1
        %s241 = scalar_select %p240, %s13, 1
        %s242 = smul.addr %s241, 8
        %s243 = scalar_lea.vmem %s6, %s242
      $region44: #{fpn_forward.3} parent=35 // pred_fallthru
        _
    $region36: #{fpn_forward.3} parent=5 // pred_fallthru
      _
    %p244 = scmp.le.s32.totalorder 1, %s13
    %p245 = scmp.lt.s32.totalorder %s13, 3
    %p246 = pnand %p244, %p245
    %p247 = pneg %p246
    // Predicated region
    $region45: #{fpn_forward.3} parent=5 // pred_check
      _
    $region46: #{fpn_forward.3} parent=5 // pred_check_branch
      %249 = sbr.rel (%p246) target = $region48
    $region47: #{fpn_forward.3} parent=5 // pred_region
      %s250 = ssub.s32 %s13, 1
      %p251 = scmp.lt.s32.totalorder %s18, 1
      %s252 = scalar_select %p251, %s18, 1
      %s253 = smul.addr %s252, 4
      %s254 = scalar_lea.vmem %s0, %s253
      %p255 = pneg %p39
      %p256 = pneg %p36
      %p257 = pneg %p60
      %p258 = pneg %p57
      %p259 = pneg %p81
      %p260 = pneg %p78
      %p261 = pneg %p102
      %p262 = pneg %p99
      %p263 = pneg %p123
      %p264 = pneg %p120
      %p265 = pneg %p144
      %p266 = pneg %p141
      %p267 = scmp.lt.s32.totalorder %s18, 1
      %s268 = scalar_select %p267, %s18, 1
      %s269 = smul.addr %s268, 8
      %s270 = scalar_lea.vmem %s6, %s269
      %p271 = pneg %p170
      %p272 = pneg %p167
      %p273 = pneg %p196
      %p274 = pneg %p193
      %p275 = scmp.lt.s32.totalorder %s18, 1
      %s276 = scalar_select %p275, %s18, 1
      %s277 = smul.addr %s276, 8
      %s278 = scalar_lea.vmem %s7, %s277
      %p279 = scmp.lt.s32.totalorder %s18, 1
      %s280 = scalar_select %p279, %s18, 1
      %s281 = smul.addr %s280, 4
      %s282 = scalar_lea.vmem %s0, %s281
      %p283 = scmp.lt.s32.totalorder %s18, 1
      %s284 = scalar_select %p283, %s18, 1
      %s285 = smul.addr %s284, 8
      %s286 = scalar_lea.vmem %s6, %s285
      %p287 = scmp.lt.s32.totalorder %s18, 1
      %s288 = scalar_select %p287, %s18, 1
      %s289 = smul.addr %s288, 8
      %s290 = scalar_lea.vmem %s7, %s289
      %v291 = vld [vmem:[%s282] sm:$0xf]
      %s292 = scalar_lea.vmem %s1, 16
      %v293 = vld [vmem:[%s292] sm:$0xff]
      %v294 = vld [vmem:[%s292 + $0x8] sm:$0xff]
      %v295 = vld [vmem:[%s2] sm:$0xf]
      %vm296 = vcmask 31744
      %v298 = vsel %vm296, %v295, 0
      %vm300 = vcmask 1043456
      %v302 = vsel %vm300, %v291, 0
      %304 = vmatpush.msra.mxu0 0.0
      %305 = vmatpush.msra.mxu0 0.0
      %306 = vmatpush.msra.mxu0 0.0
      %307 = vmatpush.msra.mxu0 0.0
      %308 = vmatpush.msra.mxu0 0.0
      %309 = vmatpush.msra.mxu0 0.0
      %310 = vmatpush.msra.mxu0 0.0
      %311 = vmatpush.msra.mxu0 0.0
      %312 = vmatpush.msra.mxu0 0.0
      %313 = vmatpush.msra.mxu0 0.0
      %314 = vmatpush.msra.mxu0 0.0
      %315 = vmatpush.msra.mxu0 0.0
      %316 = vmatpush.msra.mxu0 0.0
      %317 = vmatpush.msra.mxu0 0.0
      %318 = vmatpush.msra.mxu0 0.0
      %319 = vmatpush.msra.mxu0 %v302
      %320 = vmatmul.f32.gmra.mxu0 %v298
      %v321 = vpop.f32.mrf.mxu0
      %v322 = vadd.f32 0.0, %v321
      %323 = vdwg.mxu0
      %v324 = vld [vmem:[%s1] sm:$0xff]
      %v325 = vld [vmem:[%s1 + $0x8] sm:$0xff]
      %vm326 = vcmask 130048
      %v328 = vsel %vm326, %v322, 0
      %330 = vmatpush.msra.mxu0 0.0
      %331 = vmatpush.msra.mxu0 0.0
      %332 = vmatpush.msra.mxu0 0.0
      %333 = vmatpush.msra.mxu0 0.0
      %334 = vmatpush.msra.mxu0 0.0
      %335 = vmatpush.msra.mxu0 0.0
      %336 = vmatpush.msra.mxu0 0.0
      %337 = vmatpush.msra.mxu0 0.0
      %338 = vmatpush.msra.mxu0 0.0
      %339 = vmatpush.msra.mxu0 0.0
      %340 = vmatpush.msra.mxu0 0.0
      %341 = vmatpush.msra.mxu0 0.0
      %342 = vmatpush.msra.mxu0 0.0
      %343 = vmatpush.msra.mxu0 0.0
      %344 = vmatpush.msra.mxu0 %v325
      %345 = vmatpush.msra.mxu0 %v324
      %346 = vmatmul.f32.gmra.mxu0 %v328
      %v347 = vpop.f32.mrf.mxu0
      %v348 = vadd.f32 0.0, %v347
      %349 = vdwg.mxu0
      %v350 = vsel %vm326, %v291, 0
      %352 = vmatpush.msra.mxu0 0.0
      %353 = vmatpush.msra.mxu0 0.0
      %354 = vmatpush.msra.mxu0 0.0
      %355 = vmatpush.msra.mxu0 0.0
      %356 = vmatpush.msra.mxu0 0.0
      %357 = vmatpush.msra.mxu0 0.0
      %358 = vmatpush.msra.mxu0 0.0
      %359 = vmatpush.msra.mxu0 0.0
      %360 = vmatpush.msra.mxu0 0.0
      %361 = vmatpush.msra.mxu0 0.0
      %362 = vmatpush.msra.mxu0 0.0
      %363 = vmatpush.msra.mxu0 0.0
      %364 = vmatpush.msra.mxu0 0.0
      %365 = vmatpush.msra.mxu0 0.0
      %366 = vmatpush.msra.mxu0 %v294
      %367 = vmatpush.msra.mxu0 %v293
      %368 = vmatmul.f32.gmra.mxu0 %v350
      %v369 = vpop.f32.mrf.mxu0
      %v370 = vadd.f32 %v348, %v369
      %371 = vdwg.mxu0
      %s372 = scalar_lea.vmem %s2, 4
      %v373 = vld [vmem:[%s372] sm:$0xf]
      %v375 = vsel %vm296, %v373, 0
      %377 = vmatpush.msra.mxu0 0.0
      %378 = vmatpush.msra.mxu0 0.0
      %379 = vmatpush.msra.mxu0 0.0
      %380 = vmatpush.msra.mxu0 0.0
      %381 = vmatpush.msra.mxu0 0.0
      %382 = vmatpush.msra.mxu0 0.0
      %383 = vmatpush.msra.mxu0 0.0
      %384 = vmatpush.msra.mxu0 0.0
      %385 = vmatpush.msra.mxu0 0.0
      %386 = vmatpush.msra.mxu0 0.0
      %387 = vmatpush.msra.mxu0 0.0
      %388 = vmatpush.msra.mxu0 0.0
      %389 = vmatpush.msra.mxu0 0.0
      %390 = vmatpush.msra.mxu0 0.0
      %391 = vmatpush.msra.mxu0 0.0
      %392 = vmatpush.msra.mxu0 %v302
      %393 = vmatmul.f32.gmra.mxu0 %v375
      %v394 = vpop.f32.mrf.mxu0
      %v395 = vadd.f32 0.0, %v394
      %396 = vdwg.mxu0
      %s397 = scalar_lea.vmem %s1, 32
      %v398 = vld [vmem:[%s397] sm:$0xff]
      %v399 = vld [vmem:[%s397 + $0x8] sm:$0xff]
      %v401 = vsel %vm326, %v395, 0
      %403 = vmatpush.msra.mxu0 0.0
      %404 = vmatpush.msra.mxu0 0.0
      %405 = vmatpush.msra.mxu0 0.0
      %406 = vmatpush.msra.mxu0 0.0
      %407 = vmatpush.msra.mxu0 0.0
      %408 = vmatpush.msra.mxu0 0.0
      %409 = vmatpush.msra.mxu0 0.0
      %410 = vmatpush.msra.mxu0 0.0
      %411 = vmatpush.msra.mxu0 0.0
      %412 = vmatpush.msra.mxu0 0.0
      %413 = vmatpush.msra.mxu0 0.0
      %414 = vmatpush.msra.mxu0 0.0
      %415 = vmatpush.msra.mxu0 0.0
      %416 = vmatpush.msra.mxu0 0.0
      %417 = vmatpush.msra.mxu0 %v399
      %418 = vmatpush.msra.mxu0 %v398
      %419 = vmatmul.f32.gmra.mxu0 %v401
      %v420 = vpop.f32.mrf.mxu0
      %v421 = vadd.f32 0.0, %v420
      %422 = vdwg.mxu0
      %v423 = vadd.f32 %v370, %v421
      %v424 = vld [vmem:[%s3] sm:$0x1]
      %v426 = vperm.slane %v424, 0
      %v428 = vadd.f32 %v423, %v426
      %v429 = vmax.f32 %v428, 0.0
      %v430 = vld [vmem:[%s4] sm:$0xff]
      %v432 = vsel %vm296, %v430, 0
      %v435 = vsel %vm300, %v429, 0
      %437 = vmatpush.msra.mxu0 0.0
      %438 = vmatpush.msra.mxu0 0.0
      %439 = vmatpush.msra.mxu0 0.0
      %440 = vmatpush.msra.mxu0 0.0
      %441 = vmatpush.msra.mxu0 0.0
      %442 = vmatpush.msra.mxu0 0.0
      %443 = vmatpush.msra.mxu0 0.0
      %444 = vmatpush.msra.mxu0 0.0
      %445 = vmatpush.msra.mxu0 0.0
      %446 = vmatpush.msra.mxu0 0.0
      %447 = vmatpush.msra.mxu0 0.0
      %448 = vmatpush.msra.mxu0 0.0
      %449 = vmatpush.msra.mxu0 0.0
      %450 = vmatpush.msra.mxu0 0.0
      %451 = vmatpush.msra.mxu0 0.0
      %452 = vmatpush.msra.mxu0 %v435
      %453 = vmatmul.f32.gmra.mxu0 %v432
      %v454 = vpop.f32.mrf.mxu0
      %v455 = vadd.f32 0.0, %v454
      %456 = vdwg.mxu0
      %v457 = vld [vmem:[%s5] sm:$0xff]
      %v458 = vld [vmem:[%s5 + $0x8] sm:$0xff]
      %v459 = vld [vmem:[%s286] sm:$0xff]
      %v461 = vsel %vm326, %v455, 0
      %463 = vmatpush.msra.mxu0 0.0
      %464 = vmatpush.msra.mxu0 0.0
      %465 = vmatpush.msra.mxu0 0.0
      %466 = vmatpush.msra.mxu0 0.0
      %467 = vmatpush.msra.mxu0 0.0
      %468 = vmatpush.msra.mxu0 0.0
      %469 = vmatpush.msra.mxu0 0.0
      %470 = vmatpush.msra.mxu0 0.0
      %471 = vmatpush.msra.mxu0 0.0
      %472 = vmatpush.msra.mxu0 0.0
      %473 = vmatpush.msra.mxu0 0.0
      %474 = vmatpush.msra.mxu0 0.0
      %475 = vmatpush.msra.mxu0 0.0
      %476 = vmatpush.msra.mxu0 0.0
      %477 = vmatpush.msra.mxu0 %v458
      %478 = vmatpush.msra.mxu0 %v457
      %479 = vmatmul.f32.gmra.mxu0 %v461
      %v480 = vpop.f32.mrf.mxu0
      %v481 = vadd.f32 %v459, %v480
      %482 = vdwg.mxu0
      %vm483 = vcmask 261120
      %484 = vst.msk [vmem:[%s290] sm:$0xff] %vm483, %v481
      %p485 = scmp.lt.s32.totalorder %s18, 1
      %s486 = scalar_select %p485, %s18, 1
      %s487 = smul.addr %s486, 8
      %s488 = scalar_lea.vmem %s7, %s487
      // Predicated region
      $region49: #{fpn_forward.3} parent=47 // pred_check
        %p489 = pneg %p193
      $region50: #{fpn_forward.3} parent=47 // pred_check_branch
        %491 = sbr.rel (%p489) target = $region52
      $region51: #{fpn_forward.3} parent=47 // pred_region
        _
      $region52: #{fpn_forward.3} parent=47 // pred_fallthru
        _
    $region48: #{fpn_forward.3} parent=5 // pred_fallthru
      _
    %p492 = scmp.le.s32.totalorder 2, %s13
    // Predicated region
    $region53: #{fpn_forward.3} parent=5 // pred_check
      %p493 = pneg %p492
    $region54: #{fpn_forward.3} parent=5 // pred_check_branch
      %495 = sbr.rel (%p493) target = $region56
    $region55: #{fpn_forward.3} parent=5 // pred_region
      %s496 = ssub.s32 %s13, 2
      // Predicated region
      $region57: #{fpn_forward.3} parent=55 // pred_check
        %p497 = pneg %p199
      $region58: #{fpn_forward.3} parent=55 // pred_check_branch
        %499 = sbr.rel (%p497) target = $region60
      $region59: #{fpn_forward.3} parent=55 // pred_region
        %p500 = scmp.lt.s32.totalorder %s19, 1
        %s501 = scalar_select %p500, %s19, 1
        %s502 = smul.addr %s501, 8
        %s503 = scalar_lea.vmem %s7, %s502
      $region60: #{fpn_forward.3} parent=55 // pred_fallthru
        _
    $region56: #{fpn_forward.3} parent=5 // pred_fallthru
      _
  $region6: #{fpn_forward.3} parent=0 // loop_footer
    %s17 = sadd.s32 1, %s13
  $region7: #{fpn_forward.3} parent=0 // loop_footer_branch
    %12 = sbr.rel target = $region3
  $region8: #{fpn_forward.3} parent=0 // loop_exit
    _

// kernel: fpn_forward.4
$region0: #{fpn_forward.4}
  #allocation0 [shape = 'u32[]', space=smem, size = 0x4, offset = 0x4, fixed_abs, tag = 'smem constant byte address 0x4 - core index']
  #allocation1 [shape = 'u32[72,128]{1,0:T(1,128)}', space=vmem, size = 0x9000, scoped, tag = 'internal scratch']
  %s0 = inlined_call_operand.vmem [shape: f32[2,8,32], index: 0, kind: input, shape index: {}]
  %s1 = inlined_call_operand.vmem [shape: f32[3,32,32], index: 1, kind: input, shape index: {}]
  %s2 = inlined_call_operand.vmem [shape: f32[2,8,8], index: 2, kind: input, shape index: {}]
  %s3 = inlined_call_operand.vmem [shape: f32[1,32], index: 3, kind: input, shape index: {}]
  %s4 = inlined_call_operand.vmem [shape: f32[16,8], index: 4, kind: input, shape index: {}]
  %s5 = inlined_call_operand.vmem [shape: f32[32,64], index: 5, kind: input, shape index: {}]
  %s6 = inlined_call_operand.vmem [shape: f32[2,16,64], index: 6, kind: input, shape index: {}]
  %s7 = inlined_call_operand.vmem [shape: f32[2,16,64], index: 7, kind: output, shape index: {}]
  %s8 = sld [smem:[#allocation0]]
  $region61: #{fpn_forward.4} parent=0
    _
  %s10 = ssub.s32 1, %s8
  %s11 = scalar_select 0, %s10, %s8
  loop: start=0, step=1, limit=4
  $region2: #{fpn_forward.4} parent=0 // loop_pre_header
    _
  $region3: #{fpn_forward.4} parent=0 // loop_header
    %s13 = sphi 0, %s17
    %p14 = scmp.ge.s32.totalorder %s13, 4
    %s23 = sphi 0, %s25
    %s26 = sphi 0, %s23
    %s27 = sphi 0, %s26
    %s43 = sphi 0, %s27
    %s47 = sphi 0, %s47
    %s49 = sphi 0, %s47
    %s50 = sphi 0, %s49
    %s64 = sphi 0, %s50
    %s68 = sphi 0, %s68
    %s70 = sphi 0, %s68
    %s71 = sphi 0, %s70
    %s85 = sphi 0, %s71
    %s89 = sphi 0, %s89
    %s91 = sphi 0, %s89
    %s92 = sphi 0, %s91
    %s106 = sphi 0, %s92
    %s110 = sphi 0, %s110
    %s112 = sphi 0, %s110
    %s113 = sphi 0, %s112
    %s127 = sphi 0, %s113
    %s131 = sphi 0, %s131
    %s133 = sphi 0, %s131
    %s134 = sphi 0, %s133
    %s148 = sphi 0, %s134
    %s154 = sphi 0, %s156
    %s157 = sphi 0, %s154
    %s158 = sphi 0, %s157
    %s174 = sphi 0, %s158
    %s180 = sphi 0, %s182
    %s183 = sphi 0, %s180
    %s184 = sphi 0, %s183
    %s200 = sphi 0, %s184
  $region4: #{fpn_forward.4} parent=0 // loop_header_branch
    %16 = sbr.rel (%p14) target = $region8
  $region5: #{fpn_forward.4} parent=0 // loop_body
    %s18 = ssub.s32 %s13, 1
    %s19 = ssub.s32 %s13, 2
    %s20 = sadd.s32 %s13, 1
    %s21 = ssub.s32 %s13, %s20
    %p22 = scmp.eq.s32.totalorder %s21, 0
    %s24 = sadd.s32 %s23, 1
    %s25 = scalar_select %p22, %s23, %s24
    %p28 = pneg %p22
    %p29 = scmp.eq.s32.totalorder %s13, 1
    %p30 = por %p28, %p29
    %p31 = scmp.ne.s32.totalorder %s23, %s26
    %p32 = scmp.eq.s32.totalorder %s13, 0
    %p33 = por %p31, %p32
    %p34 = scmp.ne.s32.totalorder %s23, %s26
    %p35 = scmp.eq.s32.totalorder %s18, 1
    %p36 = por %p34, %p35
    %p37 = scmp.ne.s32.totalorder %s26, %s27
    %p38 = scmp.eq.s32.totalorder %s18, 0
    %p39 = por %p37, %p38
    %p40 = scmp.ne.s32.totalorder %s26, %s27
    %p41 = scmp.eq.s32.totalorder %s19, 1
    %p42 = por %p40, %p41
    %p44 = scmp.ne.s32.totalorder %s27, %s43
    %p45 = scmp.eq.s32.totalorder %s19, 0
    %p46 = por %p44, %p45
    %s48 = sadd.s32 %s47, 1
    %p51 = scmp.eq.s32.totalorder %s13, 1
    %p52 = scmp.ne.s32.totalorder %s47, %s49
    %p53 = scmp.eq.s32.totalorder %s13, 0
    %p54 = por %p52, %p53
    %p55 = scmp.ne.s32.totalorder %s47, %s49
    %p56 = scmp.eq.s32.totalorder %s18, 1
    %p57 = por %p55, %p56
    %p58 = scmp.ne.s32.totalorder %s49, %s50
    %p59 = scmp.eq.s32.totalorder %s18, 0
    %p60 = por %p58, %p59
    %p61 = scmp.ne.s32.totalorder %s49, %s50
    %p62 = scmp.eq.s32.totalorder %s19, 1
    %p63 = por %p61, %p62
    %p65 = scmp.ne.s32.totalorder %s50, %s64
    %p66 = scmp.eq.s32.totalorder %s19, 0
    %p67 = por %p65, %p66
    %s69 = sadd.s32 %s68, 1
    %p72 = scmp.eq.s32.totalorder %s13, 1
    %p73 = scmp.ne.s32.totalorder %s68, %s70
    %p74 = scmp.eq.s32.totalorder %s13, 0
    %p75 = por %p73, %p74
    %p76 = scmp.ne.s32.totalorder %s68, %s70
    %p77 = scmp.eq.s32.totalorder %s18, 1
    %p78 = por %p76, %p77
    %p79 = scmp.ne.s32.totalorder %s70, %s71
    %p80 = scmp.eq.s32.totalorder %s18, 0
    %p81 = por %p79, %p80
    %p82 = scmp.ne.s32.totalorder %s70, %s71
    %p83 = scmp.eq.s32.totalorder %s19, 1
    %p84 = por %p82, %p83
    %p86 = scmp.ne.s32.totalorder %s71, %s85
    %p87 = scmp.eq.s32.totalorder %s19, 0
    %p88 = por %p86, %p87
    %s90 = sadd.s32 %s89, 1
    %p93 = scmp.eq.s32.totalorder %s13, 1
    %p94 = scmp.ne.s32.totalorder %s89, %s91
    %p95 = scmp.eq.s32.totalorder %s13, 0
    %p96 = por %p94, %p95
    %p97 = scmp.ne.s32.totalorder %s89, %s91
    %p98 = scmp.eq.s32.totalorder %s18, 1
    %p99 = por %p97, %p98
    %p100 = scmp.ne.s32.totalorder %s91, %s92
    %p101 = scmp.eq.s32.totalorder %s18, 0
    %p102 = por %p100, %p101
    %p103 = scmp.ne.s32.totalorder %s91, %s92
    %p104 = scmp.eq.s32.totalorder %s19, 1
    %p105 = por %p103, %p104
    %p107 = scmp.ne.s32.totalorder %s92, %s106
    %p108 = scmp.eq.s32.totalorder %s19, 0
    %p109 = por %p107, %p108
    %s111 = sadd.s32 %s110, 1
    %p114 = scmp.eq.s32.totalorder %s13, 1
    %p115 = scmp.ne.s32.totalorder %s110, %s112
    %p116 = scmp.eq.s32.totalorder %s13, 0
    %p117 = por %p115, %p116
    %p118 = scmp.ne.s32.totalorder %s110, %s112
    %p119 = scmp.eq.s32.totalorder %s18, 1
    %p120 = por %p118, %p119
    %p121 = scmp.ne.s32.totalorder %s112, %s113
    %p122 = scmp.eq.s32.totalorder %s18, 0
    %p123 = por %p121, %p122
    %p124 = scmp.ne.s32.totalorder %s112, %s113
    %p125 = scmp.eq.s32.totalorder %s19, 1
    %p126 = por %p124, %p125
    %p128 = scmp.ne.s32.totalorder %s113, %s127
    %p129 = scmp.eq.s32.totalorder %s19, 0
    %p130 = por %p128, %p129
    %s132 = sadd.s32 %s131, 1
    %p135 = scmp.eq.s32.totalorder %s13, 1
    %p136 = scmp.ne.s32.totalorder %s131, %s133
    %p137 = scmp.eq.s32.totalorder %s13, 0
    %p138 = por %p136, %p137
    %p139 = scmp.ne.s32.totalorder %s131, %s133
    %p140 = scmp.eq.s32.totalorder %s18, 1
    %p141 = por %p139, %p140
    %p142 = scmp.ne.s32.totalorder %s133, %s134
    %p143 = scmp.eq.s32.totalorder %s18, 0
    %p144 = por %p142, %p143
    %p145 = scmp.ne.s32.totalorder %s133, %s134
    %p146 = scmp.eq.s32.totalorder %s19, 1
    %p147 = por %p145, %p146
    %p149 = scmp.ne.s32.totalorder %s134, %s148
    %p150 = scmp.eq.s32.totalorder %s19, 0
    %p151 = por %p149, %p150
    %s152 = ssub.s32 %s13, %s20
    %p153 = scmp.eq.s32.totalorder %s152, 0
    %s155 = sadd.s32 %s154, 1
    %s156 = scalar_select %p153, %s154, %s155
    %p159 = pneg %p153
    %p160 = scmp.eq.s32.totalorder %s13, 1
    %p161 = por %p159, %p160
    %p162 = scmp.ne.s32.totalorder %s154, %s157
    %p163 = scmp.eq.s32.totalorder %s13, 0
    %p164 = por %p162, %p163
    %p165 = scmp.ne.s32.totalorder %s154, %s157
    %p166 = scmp.eq.s32.totalorder %s18, 1
    %p167 = por %p165, %p166
    %p168 = scmp.ne.s32.totalorder %s157, %s158
    %p169 = scmp.eq.s32.totalorder %s18, 0
    %p170 = por %p168, %p169
    %p171 = scmp.ne.s32.totalorder %s157, %s158
    %p172 = scmp.eq.s32.totalorder %s19, 1
    %p173 = por %p171, %p172
    %p175 = scmp.ne.s32.totalorder %s158, %s174
    %p176 = scmp.eq.s32.totalorder %s19, 0
    %p177 = por %p175, %p176
    %s178 = ssub.s32 %s13, %s20
    %p179 = scmp.eq.s32.totalorder %s178, 0
    %s181 = sadd.s32 %s180, 1
    %s182 = scalar_select %p179, %s180, %s181
    %p185 = pneg %p179
    %p186 = scmp.eq.s32.totalorder %s13, 1
    %p187 = por %p185, %p186
    %p188 = scmp.ne.s32.totalorder %s180, %s183
    %p189 = scmp.eq.s32.totalorder %s13, 0
    %p190 = por %p188, %p189
    %p191 = scmp.ne.s32.totalorder %s180, %s183
    %p192 = scmp.eq.s32.totalorder %s18, 1
    %p193 = por %p191, %p192
    %p194 = scmp.ne.s32.totalorder %s183, %s184
    %p195 = scmp.eq.s32.totalorder %s18, 0
    %p196 = por %p194, %p195
    %p197 = scmp.ne.s32.totalorder %s183, %s184
    %p198 = scmp.eq.s32.totalorder %s19, 1
    %p199 = por %p197, %p198
    %p201 = scmp.ne.s32.totalorder %s184, %s200
    %p202 = scmp.eq.s32.totalorder %s19, 0
    %p203 = por %p201, %p202
    %p204 = scmp.le.s32.totalorder 1, %s13
    %p205 = scmp.lt.s32.totalorder %s13, 3
    %p206 = pnand %p204, %p205
    %p207 = pneg %p206
    // Predicated region
    $region9: #{fpn_forward.4} parent=5 // pred_check
      _
    $region10: #{fpn_forward.4} parent=5 // pred_check_branch
      %209 = sbr.rel (%p206) target = $region12
    $region11: #{fpn_forward.4} parent=5 // pred_region
      %s210 = ssub.s32 %s13, 1
      // Predicated region
      $region13: #{fpn_forward.4} parent=11 // pred_check
        %p211 = pneg %p60
      $region14: #{fpn_forward.4} parent=11 // pred_check_branch
        %213 = sbr.rel (%p211) target = $region16
      $region15: #{fpn_forward.4} parent=11 // pred_region
        _
      $region16: #{fpn_forward.4} parent=11 // pred_fallthru
        _
      // Predicated region
      $region17: #{fpn_forward.4} parent=11 // pred_check
        %p214 = pneg %p81
      $region18: #{fpn_forward.4} parent=11 // pred_check_branch
        %216 = sbr.rel (%p214) target = $region20
      $region19: #{fpn_forward.4} parent=11 // pred_region
        _
      $region20: #{fpn_forward.4} parent=11 // pred_fallthru
        _
      // Predicated region
      $region21: #{fpn_forward.4} parent=11 // pred_check
        %p217 = pneg %p102
      $region22: #{fpn_forward.4} parent=11 // pred_check_branch
        %219 = sbr.rel (%p217) target = $region24
      $region23: #{fpn_forward.4} parent=11 // pred_region
        _
      $region24: #{fpn_forward.4} parent=11 // pred_fallthru
        _
      // Predicated region
      $region25: #{fpn_forward.4} parent=11 // pred_check
        %p220 = pneg %p123
      $region26: #{fpn_forward.4} parent=11 // pred_check_branch
        %222 = sbr.rel (%p220) target = $region28
      $region27: #{fpn_forward.4} parent=11 // pred_region
        _
      $region28: #{fpn_forward.4} parent=11 // pred_fallthru
        _
      // Predicated region
      $region29: #{fpn_forward.4} parent=11 // pred_check
        %p223 = pneg %p144
      $region30: #{fpn_forward.4} parent=11 // pred_check_branch
        %225 = sbr.rel (%p223) target = $region32
      $region31: #{fpn_forward.4} parent=11 // pred_region
        _
      $region32: #{fpn_forward.4} parent=11 // pred_fallthru
        _
    $region12: #{fpn_forward.4} parent=5 // pred_fallthru
      _
    %p226 = scmp.lt.s32.totalorder %s13, 2
    // Predicated region
    $region33: #{fpn_forward.4} parent=5 // pred_check
      %p227 = pneg %p226
    $region34: #{fpn_forward.4} parent=5 // pred_check_branch
      %229 = sbr.rel (%p227) target = $region36
    $region35: #{fpn_forward.4} parent=5 // pred_region
      // Predicated region
      $region37: #{fpn_forward.4} parent=35 // pred_check
        %p230 = pneg %p33
      $region38: #{fpn_forward.4} parent=35 // pred_check_branch
        %232 = sbr.rel (%p230) target = $region40
      $region39: #{fpn_forward.4} parent=35 // pred_region
        %p233 = scmp.lt.s32.totalorder %s13, 1
        %s234 = scalar_select %p233, %s13, 1
        %s235 = smul.addr %s234, 8
        %s236 = scalar_lea.vmem %s0, %s235
      $region40: #{fpn_forward.4} parent=35 // pred_fallthru
        _
      // Predicated region
      $region41: #{fpn_forward.4} parent=35 // pred_check
        %p237 = pneg %p164
      $region42: #{fpn_forward.4} parent=35 // pred_check_branch
        %239 = sbr.rel (%p237) target = $region44
      $region43: #{fpn_forward.4} parent=35 // pred_region
        %p240 = scmp.lt.s32.totalorder %s13, 1
        %s241 = scalar_select %p240, %s13, 1
        %s242 = smul.addr %s241, 2
        %s243 = smul.addr %s242, 8
        %s244 = scalar_lea.vmem %s6, %s243
      $region44: #{fpn_forward.4} parent=35 // pred_fallthru
        _
    $region36: #{fpn_forward.4} parent=5 // pred_fallthru
      _
    %p245 = scmp.le.s32.totalorder 1, %s13
    %p246 = scmp.lt.s32.totalorder %s13, 3
    %p247 = pnand %p245, %p246
    %p248 = pneg %p247
    // Predicated region
    $region45: #{fpn_forward.4} parent=5 // pred_check
      _
    $region46: #{fpn_forward.4} parent=5 // pred_check_branch
      %250 = sbr.rel (%p247) target = $region48
    $region47: #{fpn_forward.4} parent=5 // pred_region
      %s251 = ssub.s32 %s13, 1
      %p252 = scmp.lt.s32.totalorder %s18, 1
      %s253 = scalar_select %p252, %s18, 1
      %s254 = smul.addr %s253, 8
      %s255 = scalar_lea.vmem %s0, %s254
      %p256 = pneg %p39
      %p257 = pneg %p36
      %p258 = pneg %p60
      %p259 = pneg %p57
      %p260 = pneg %p81
      %p261 = pneg %p78
      %p262 = pneg %p102
      %p263 = pneg %p99
      %p264 = pneg %p123
      %p265 = pneg %p120
      %p266 = pneg %p144
      %p267 = pneg %p141
      %p268 = scmp.lt.s32.totalorder %s18, 1
      %s269 = scalar_select %p268, %s18, 1
      %s270 = smul.addr %s269, 2
      %s271 = smul.addr %s270, 8
      %s272 = scalar_lea.vmem %s6, %s271
      %p273 = pneg %p170
      %p274 = pneg %p167
      %p275 = pneg %p196
      %p276 = pneg %p193
      %p277 = scmp.lt.s32.totalorder %s18, 1
      %s278 = scalar_select %p277, %s18, 1
      %s279 = smul.addr %s278, 2
      %s280 = smul.addr %s279, 8
      %s281 = scalar_lea.vmem %s7, %s280
      %p282 = scmp.lt.s32.totalorder %s18, 1
      %s283 = scalar_select %p282, %s18, 1
      %s284 = smul.addr %s283, 8
      %s285 = scalar_lea.vmem %s0, %s284
      %p286 = scmp.lt.s32.totalorder %s18, 1
      %s287 = scalar_select %p286, %s18, 1
      %s288 = smul.addr %s287, 2
      %s289 = smul.addr %s288, 8
      %s290 = scalar_lea.vmem %s6, %s289
      %p291 = scmp.lt.s32.totalorder %s18, 1
      %s292 = scalar_select %p291, %s18, 1
      %s293 = smul.addr %s292, 2
      %s294 = smul.addr %s293, 8
      %s295 = scalar_lea.vmem %s7, %s294
      %v296 = vld [vmem:[%s285] sm:$0xff]
      %s297 = scalar_lea.vmem %s1, 32
      %v298 = vld [vmem:[%s297] sm:$0xff]
      %v299 = vld [vmem:[%s297 + $0x8] sm:$0xff]
      %v300 = vld [vmem:[%s297 + $0x10] sm:$0xff]
      %v301 = vld [vmem:[%s297 + $0x18] sm:$0xff]
      %v302 = vld [vmem:[%s2] sm:$0xff]
      %vm303 = vcmask 64512
      %v305 = vsel %vm303, %v302, 0
      %307 = vmatpush.msra.mxu0 0.0
      %308 = vmatpush.msra.mxu0 0.0
      %309 = vmatpush.msra.mxu0 0.0
      %310 = vmatpush.msra.mxu0 0.0
      %311 = vmatpush.msra.mxu0 0.0
      %312 = vmatpush.msra.mxu0 0.0
      %313 = vmatpush.msra.mxu0 0.0
      %314 = vmatpush.msra.mxu0 0.0
      %315 = vmatpush.msra.mxu0 0.0
      %316 = vmatpush.msra.mxu0 0.0
      %317 = vmatpush.msra.mxu0 0.0
      %318 = vmatpush.msra.mxu0 0.0
      %319 = vmatpush.msra.mxu0 0.0
      %320 = vmatpush.msra.mxu0 0.0
      %321 = vmatpush.msra.mxu0 0.0
      %322 = vmatpush.msra.mxu0 %v296
      %323 = vmatmul.f32.gmra.mxu0 %v305
      %v324 = vpop.f32.mrf.mxu0
      %v325 = vadd.f32 0.0, %v324
      %326 = vdwg.mxu0
      %v327 = vld [vmem:[%s1] sm:$0xff]
      %v328 = vld [vmem:[%s1 + $0x8] sm:$0xff]
      %v329 = vld [vmem:[%s1 + $0x10] sm:$0xff]
      %v330 = vld [vmem:[%s1 + $0x18] sm:$0xff]
      %vm331 = vcmask 261120
      %v333 = vsel %vm331, %v325, 0
      %335 = vmatpush.msra.mxu0 0.0
      %336 = vmatpush.msra.mxu0 0.0
      %337 = vmatpush.msra.mxu0 0.0
      %338 = vmatpush.msra.mxu0 0.0
      %339 = vmatpush.msra.mxu0 0.0
      %340 = vmatpush.msra.mxu0 0.0
      %341 = vmatpush.msra.mxu0 0.0
      %342 = vmatpush.msra.mxu0 0.0
      %343 = vmatpush.msra.mxu0 0.0
      %344 = vmatpush.msra.mxu0 0.0
      %345 = vmatpush.msra.mxu0 0.0
      %346 = vmatpush.msra.mxu0 0.0
      %347 = vmatpush.msra.mxu0 %v330
      %348 = vmatpush.msra.mxu0 %v329
      %349 = vmatpush.msra.mxu0 %v328
      %350 = vmatpush.msra.mxu0 %v327
      %351 = vmatmul.f32.gmra.mxu0 %v333
      %v352 = vpop.f32.mrf.mxu0
      %v353 = vadd.f32 0.0, %v352
      %354 = vdwg.mxu0
      %v356 = vsel %vm331, %v296, 0
      %358 = vmatpush.msra.mxu0 0.0
      %359 = vmatpush.msra.mxu0 0.0
      %360 = vmatpush.msra.mxu0 0.0
      %361 = vmatpush.msra.mxu0 0.0
      %362 = vmatpush.msra.mxu0 0.0
      %363 = vmatpush.msra.mxu0 0.0
      %364 = vmatpush.msra.mxu0 0.0
      %365 = vmatpush.msra.mxu0 0.0
      %366 = vmatpush.msra.mxu0 0.0
      %367 = vmatpush.msra.mxu0 0.0
      %368 = vmatpush.msra.mxu0 0.0
      %369 = vmatpush.msra.mxu0 0.0
      %370 = vmatpush.msra.mxu0 %v301
      %371 = vmatpush.msra.mxu0 %v300
      %372 = vmatpush.msra.mxu0 %v299
      %373 = vmatpush.msra.mxu0 %v298
      %374 = vmatmul.f32.gmra.mxu0 %v356
      %v375 = vpop.f32.mrf.mxu0
      %v376 = vadd.f32 %v353, %v375
      %377 = vdwg.mxu0
      %s378 = scalar_lea.vmem %s2, 8
      %v379 = vld [vmem:[%s378] sm:$0xff]
      %v381 = vsel %vm303, %v379, 0
      %383 = vmatpush.msra.mxu0 0.0
      %384 = vmatpush.msra.mxu0 0.0
      %385 = vmatpush.msra.mxu0 0.0
      %386 = vmatpush.msra.mxu0 0.0
      %387 = vmatpush.msra.mxu0 0.0
      %388 = vmatpush.msra.mxu0 0.0
      %389 = vmatpush.msra.mxu0 0.0
      %390 = vmatpush.msra.mxu0 0.0
      %391 = vmatpush.msra.mxu0 0.0
      %392 = vmatpush.msra.mxu0 0.0
      %393 = vmatpush.msra.mxu0 0.0
      %394 = vmatpush.msra.mxu0 0.0
      %395 = vmatpush.msra.mxu0 0.0
      %396 = vmatpush.msra.mxu0 0.0
      %397 = vmatpush.msra.mxu0 0.0
      %398 = vmatpush.msra.mxu0 %v296
      %399 = vmatmul.f32.gmra.mxu0 %v381
      %v400 = vpop.f32.mrf.mxu0
      %v401 = vadd.f32 0.0, %v400
      %402 = vdwg.mxu0
      %s403 = scalar_lea.vmem %s1, 64
      %v404 = vld [vmem:[%s403] sm:$0xff]
      %v405 = vld [vmem:[%s403 + $0x8] sm:$0xff]
      %v406 = vld [vmem:[%s403 + $0x10] sm:$0xff]
      %v407 = vld [vmem:[%s403 + $0x18] sm:$0xff]
      %v409 = vsel %vm331, %v401, 0
      %411 = vmatpush.msra.mxu0 0.0
      %412 = vmatpush.msra.mxu0 0.0
      %413 = vmatpush.msra.mxu0 0.0
      %414 = vmatpush.msra.mxu0 0.0
      %415 = vmatpush.msra.mxu0 0.0
      %416 = vmatpush.msra.mxu0 0.0
      %417 = vmatpush.msra.mxu0 0.0
      %418 = vmatpush.msra.mxu0 0.0
      %419 = vmatpush.msra.mxu0 0.0
      %420 = vmatpush.msra.mxu0 0.0
      %421 = vmatpush.msra.mxu0 0.0
      %422 = vmatpush.msra.mxu0 0.0
      %423 = vmatpush.msra.mxu0 %v407
      %424 = vmatpush.msra.mxu0 %v406
      %425 = vmatpush.msra.mxu0 %v405
      %426 = vmatpush.msra.mxu0 %v404
      %427 = vmatmul.f32.gmra.mxu0 %v409
      %v428 = vpop.f32.mrf.mxu0
      %v429 = vadd.f32 0.0, %v428
      %430 = vdwg.mxu0
      %v431 = vadd.f32 %v376, %v429
      %v432 = vld [vmem:[%s3] sm:$0x1]
      %v434 = vperm.slane %v432, 0
      %v436 = vadd.f32 %v431, %v434
      %v437 = vmax.f32 %v436, 0.0
      %v438 = vld [vmem:[%s4] sm:$0xff]
      %v439 = vld [vmem:[%s4 + $0x8] sm:$0xff]
      %v441 = vsel %vm303, %v438, 0
      %v444 = vsel %vm303, %v439, 0
      %446 = vmatpush.msra.mxu0 0.0
      %447 = vmatpush.msra.mxu0 0.0
      %448 = vmatpush.msra.mxu0 0.0
      %449 = vmatpush.msra.mxu0 0.0
      %450 = vmatpush.msra.mxu0 0.0
      %451 = vmatpush.msra.mxu0 0.0
      %452 = vmatpush.msra.mxu0 0.0
      %453 = vmatpush.msra.mxu0 0.0
      %454 = vmatpush.msra.mxu0 0.0
      %455 = vmatpush.msra.mxu0 0.0
      %456 = vmatpush.msra.mxu0 0.0
      %457 = vmatpush.msra.mxu0 0.0
      %458 = vmatpush.msra.mxu0 0.0
      %459 = vmatpush.msra.mxu0 0.0
      %460 = vmatpush.msra.mxu0 0.0
      %461 = vmatpush.msra.mxu0 %v437
      %462 = vmatmul.f32.gmra.mxu0 %v441
      %v463 = vpop.f32.mrf.mxu0
      %v464 = vadd.f32 0.0, %v463
      %465 = vmatmul.f32.gmra.mxu0 %v444
      %v466 = vpop.f32.mrf.mxu0
      %v467 = vadd.f32 0.0, %v466
      %468 = vdwg.mxu0
      %v469 = vld [vmem:[%s5] sm:$0xff]
      %v470 = vld [vmem:[%s5 + $0x8] sm:$0xff]
      %v471 = vld [vmem:[%s5 + $0x10] sm:$0xff]
      %v472 = vld [vmem:[%s5 + $0x18] sm:$0xff]
      %v473 = vld [vmem:[%s290] sm:$0xff]
      %v474 = vld [vmem:[%s290 + $0x8] sm:$0xff]
      %v476 = vsel %vm331, %v464, 0
      %v479 = vsel %vm331, %v467, 0
      %481 = vmatpush.msra.mxu0 0.0
      %482 = vmatpush.msra.mxu0 0.0
      %483 = vmatpush.msra.mxu0 0.0
      %484 = vmatpush.msra.mxu0 0.0
      %485 = vmatpush.msra.mxu0 0.0
      %486 = vmatpush.msra.mxu0 0.0
      %487 = vmatpush.msra.mxu0 0.0
      %488 = vmatpush.msra.mxu0 0.0
      %489 = vmatpush.msra.mxu0 0.0
      %490 = vmatpush.msra.mxu0 0.0
      %491 = vmatpush.msra.mxu0 0.0
      %492 = vmatpush.msra.mxu0 0.0
      %493 = vmatpush.msra.mxu0 %v472
      %494 = vmatpush.msra.mxu0 %v471
      %495 = vmatpush.msra.mxu0 %v470
      %496 = vmatpush.msra.mxu0 %v469
      %497 = vmatmul.f32.gmra.mxu0 %v476
      %v498 = vpop.f32.mrf.mxu0
      %v499 = vadd.f32 %v473, %v498
      %500 = vmatmul.f32.gmra.mxu0 %v479
      %v501 = vpop.f32.mrf.mxu0
      %v502 = vadd.f32 %v474, %v501
      %503 = vdwg.mxu0
      %vm504 = vcmask 523264
      %505 = vst.msk [vmem:[%s295] sm:$0xff] %vm504, %v499
      %506 = vst.msk [vmem:[%s295 + $0x8] sm:$0xff] %vm504, %v502
      %p507 = scmp.lt.s32.totalorder %s18, 1
      %s508 = scalar_select %p507, %s18, 1
      %s509 = smul.addr %s508, 2
      %s510 = smul.addr %s509, 8
      %s511 = scalar_lea.vmem %s7, %s510
      // Predicated region
      $region49: #{fpn_forward.4} parent=47 // pred_check
        %p512 = pneg %p193
      $region50: #{fpn_forward.4} parent=47 // pred_check_branch
        %514 = sbr.rel (%p512) target = $region52
      $region51: #{fpn_forward.4} parent=47 // pred_region
        _
      $region52: #{fpn_forward.4} parent=47 // pred_fallthru
        _
    $region48: #{fpn_forward.4} parent=5 // pred_fallthru
      _
    %p515 = scmp.le.s32.totalorder 2, %s13
    // Predicated region
    $region53: #{fpn_forward.4} parent=5 // pred_check
      %p516 = pneg %p515
    $region54: #{fpn_forward.4} parent=5 // pred_check_branch
      %518 = sbr.rel (%p516) target = $region56
    $region55: #{fpn_forward.4} parent=5 // pred_region
      %s519 = ssub.s32 %s13, 2
      // Predicated region
      $region57: #{fpn_forward.4} parent=55 // pred_check
        %p520 = pneg %p199
      $region58: #{fpn_forward.4} parent=55 // pred_check_branch
        %522 = sbr.rel (%p520) target = $region60
      $region59: #{fpn_forward.4} parent=55 // pred_region
        %p523 = scmp.lt.s32.totalorder %s19, 1
        %s524 = scalar_select %p523, %s19, 1
        %s525 = smul.addr %s524, 2
        %s526 = smul.addr %s525, 8
        %s527 = scalar_lea.vmem %s7, %s526
      $region60: #{fpn_forward.4} parent=55 // pred_fallthru
        _
    $region56: #{fpn_forward.4} parent=5 // pred_fallthru
      _
  $region6: #{fpn_forward.4} parent=0 // loop_footer
    %s17 = sadd.s32 1, %s13
  $region7: #{fpn_forward.4} parent=0 // loop_footer_branch
    %12 = sbr.rel target = $region3
  $region8: #{fpn_forward.4} parent=0 // loop_exit
    _

// kernel: tile.28
$region0: #{tile.28}
  #allocation0 [shape = 's32[1]{0}', space=sflag, size = 0x4, scoped, tag = 'scoped memory for tile.28']
  %s0 = inlined_call_operand.vmem [shape: f32[4], index: 0, kind: input, shape index: {}]
  %s1 = inlined_call_operand.vmem [shape: f32[16,4], index: 1, kind: output, shape index: {}]
  // Predicated region
  $region2: #{tile.28} parent=0 // pred_check
    _
  $region3: #{tile.28} parent=0 // pred_check_branch
    %3 = sbr.rel (0) target = $region5
  $region4: #{tile.28} parent=0 // pred_region
    _
  $region5: #{tile.28} parent=0 // pred_fallthru
    _
  %v4 = vld [vmem:[%s0] ss:$0 sm:$0xff]
  %5 = vst [vmem:[%s1] sm:$0xff] %v4
  %s6 = scalar_lea.vmem %s1, 8
  %7 = vst [vmem:[%s6] sm:$0xff] %v4

// kernel: tile.29
$region0: #{tile.29}
  %s0 = inlined_call_operand.vmem [shape: f32[16,4], index: 0, kind: input, shape index: {}]
  %s1 = inlined_call_operand.vmem [shape: f32[1,64], index: 1, kind: output, shape index: {}]
  $region1: #{tile.29} parent=0
    #allocation0 [shape = 'u8[4096]{0}', space=vmem, size = 0x1000, scoped, tag = 'scoped mem for output reshape']
    %v2 = vld [vmem:[%s0] sm:$0x1]
    %vm3 = vcmask 31744
    %4 = vst.msk [vmem:[#allocation0] sm:$0x1] %vm3, %v2
    %s5 = scalar_lea.vmem %s0, 15
    %v6 = vld [vmem:[%s5] sm:$0x1]
    %7 = vrot.lane.b32.xlu0 %v6, 60
    %v8 = vpop.permute.xlu0 %7
    %vm9 = vcmask 523744
    %10 = vst.msk [vmem:[#allocation0] sm:$0x1] %vm9, %v8
    %s11 = scalar_lea.vmem %s0, 14
    %v12 = vld [vmem:[%s11] sm:$0x1]
    %13 = vrot.lane.b32.xlu0 %v12, 56
    %v14 = vpop.permute.xlu0 %13
    %vm15 = vcmask 490944
    %16 = vst.msk [vmem:[#allocation0] sm:$0x1] %vm15, %v14
    %s17 = scalar_lea.vmem %s0, 13
    %v18 = vld [vmem:[%s17] sm:$0x1]
    %19 = vrot.lane.b32.xlu0 %v18, 52
    %v20 = vpop.permute.xlu0 %19
    %vm21 = vcmask 458144
    %22 = vst.msk [vmem:[#allocation0] sm:$0x1] %vm21, %v20
    %s23 = scalar_lea.vmem %s0, 12
    %v24 = vld [vmem:[%s23] sm:$0x1]
    %25 = vrot.lane.b32.xlu0 %v24, 48
    %v26 = vpop.permute.xlu0 %25
    %vm27 = vcmask 425344
    %28 = vst.msk [vmem:[#allocation0] sm:$0x1] %vm27, %v26
    %s29 = scalar_lea.vmem %s0, 11
    %v30 = vld [vmem:[%s29] sm:$0x1]
    %31 = vrot.lane.b32.xlu0 %v30, 44
    %v32 = vpop.permute.xlu0 %31
    %vm33 = vcmask 392544
    %34 = vst.msk [vmem:[#allocation0] sm:$0x1] %vm33, %v32
    %s35 = scalar_lea.vmem %s0, 10
    %v36 = vld [vmem:[%s35] sm:$0x1]
    %37 = vrot.lane.b32.xlu0 %v36, 40
    %v38 = vpop.permute.xlu0 %37
    %vm39 = vcmask 359744
    %40 = vst.msk [vmem:[#allocation0] sm:$0x1] %vm39, %v38
    %s41 = scalar_lea.vmem %s0, 9
    %v42 = vld [vmem:[%s41] sm:$0x1]
    %43 = vrot.lane.b32.xlu0 %v42, 36
    %v44 = vpop.permute.xlu0 %43
    %vm45 = vcmask 326944
    %46 = vst.msk [vmem:[#allocation0] sm:$0x1] %vm45, %v44
    %s47 = scalar_lea.vmem %s0, 8
    %v48 = vld [vmem:[%s47] sm:$0x1]
    %49 = vrot.lane.b32.xlu0 %v48, 32
    %v50 = vpop.permute.xlu0 %49
    %vm51 = vcmask 294144
    %52 = vst.msk [vmem:[#allocation0] sm:$0x1] %vm51, %v50
    %s53 = scalar_lea.vmem %s0, 7
    %v54 = vld [vmem:[%s53] sm:$0x1]
    %55 = vrot.lane.b32.xlu0 %v54, 28
    %v56 = vpop.permute.xlu0 %55
    %vm57 = vcmask 261344
    %58 = vst.msk [vmem:[#allocation0] sm:$0x1] %vm57, %v56
    %s59 = scalar_lea.vmem %s0, 6
    %v60 = vld [vmem:[%s59] sm:$0x1]
    %61 = vrot.lane.b32.xlu0 %v60, 24
    %v62 = vpop.permute.xlu0 %61
    %vm63 = vcmask 228544
    %64 = vst.msk [vmem:[#allocation0] sm:$0x1] %vm63, %v62
    %s65 = scalar_lea.vmem %s0, 5
    %v66 = vld [vmem:[%s65] sm:$0x1]
    %67 = vrot.lane.b32.xlu0 %v66, 20
    %v68 = vpop.permute.xlu0 %67
    %vm69 = vcmask 195744
    %70 = vst.msk [vmem:[#allocation0] sm:$0x1] %vm69, %v68
    %s71 = scalar_lea.vmem %s0, 4
    %v72 = vld [vmem:[%s71] sm:$0x1]
    %73 = vrot.lane.b32.xlu0 %v72, 16
    %v74 = vpop.permute.xlu0 %73
    %vm75 = vcmask 162944
    %76 = vst.msk [vmem:[#allocation0] sm:$0x1] %vm75, %v74
    %s77 = scalar_lea.vmem %s0, 3
    %v78 = vld [vmem:[%s77] sm:$0x1]
    %79 = vrot.lane.b32.xlu0 %v78, 12
    %v80 = vpop.permute.xlu0 %79
    %vm81 = vcmask 130144
    %82 = vst.msk [vmem:[#allocation0] sm:$0x1] %vm81, %v80
    %s83 = scalar_lea.vmem %s0, 2
    %v84 = vld [vmem:[%s83] sm:$0x1]
    %85 = vrot.lane.b32.xlu0 %v84, 8
    %v86 = vpop.permute.xlu0 %85
    %vm87 = vcmask 97344
    %88 = vst.msk [vmem:[#allocation0] sm:$0x1] %vm87, %v86
    %s89 = scalar_lea.vmem %s0, 1
    %v90 = vld [vmem:[%s89] sm:$0x1]
    %91 = vrot.lane.b32.xlu0 %v90, 4
    %v92 = vpop.permute.xlu0 %91
    %vm93 = vcmask 64544
    %94 = vst.msk [vmem:[#allocation0] sm:$0x1] %vm93, %v92
    %s96 = ssub.s32 2, 1
    %v97 = vld [vmem:[#allocation0] sm:%s96]
    %s99 = ssub.s32 2, 1
    %100 = vst [vmem:[%s1] sm:%s99] %v97

// kernel: fpn_forward.5
$region0: #{fpn_forward.5}
  #allocation0 [shape = 'u32[]', space=smem, size = 0x4, offset = 0x4, fixed_abs, tag = 'smem constant byte address 0x4 - core index']
  #allocation1 [shape = 'u32[72,128]{1,0:T(1,128)}', space=vmem, size = 0x9000, scoped, tag = 'internal scratch']
  %s0 = inlined_call_operand.vmem [shape: f32[2,16,64], index: 0, kind: input, shape index: {}]
  %s1 = inlined_call_operand.vmem [shape: f32[3,64,64], index: 1, kind: input, shape index: {}]
  %s2 = inlined_call_operand.vmem [shape: f32[2,16,16], index: 2, kind: input, shape index: {}]
  %s3 = inlined_call_operand.vmem [shape: f32[1,64], index: 3, kind: input, shape index: {}]
  %s4 = inlined_call_operand.vmem [shape: f32[32,16], index: 4, kind: input, shape index: {}]
  %s5 = inlined_call_operand.vmem [shape: f32[64,128], index: 5, kind: input, shape index: {}]
  %s6 = inlined_call_operand.vmem [shape: f32[2,32,128], index: 6, kind: input, shape index: {}]
  %s7 = inlined_call_operand.vmem [shape: f32[2,32,128], index: 7, kind: output, shape index: {}]
  %s8 = sld [smem:[#allocation0]]
  $region61: #{fpn_forward.5} parent=0
    _
  %s10 = ssub.s32 1, %s8
  %s11 = scalar_select 0, %s10, %s8
  loop: start=0, step=1, limit=4
  $region2: #{fpn_forward.5} parent=0 // loop_pre_header
    _
  $region3: #{fpn_forward.5} parent=0 // loop_header
    %s13 = sphi 0, %s17
    %p14 = scmp.ge.s32.totalorder %s13, 4
    %s23 = sphi 0, %s25
    %s26 = sphi 0, %s23
    %s27 = sphi 0, %s26
    %s43 = sphi 0, %s27
    %s47 = sphi 0, %s47
    %s49 = sphi 0, %s47
    %s50 = sphi 0, %s49
    %s64 = sphi 0, %s50
    %s68 = sphi 0, %s68
    %s70 = sphi 0, %s68
    %s71 = sphi 0, %s70
    %s85 = sphi 0, %s71
    %s89 = sphi 0, %s89
    %s91 = sphi 0, %s89
    %s92 = sphi 0, %s91
    %s106 = sphi 0, %s92
    %s110 = sphi 0, %s110
    %s112 = sphi 0, %s110
    %s113 = sphi 0, %s112
    %s127 = sphi 0, %s113
    %s131 = sphi 0, %s131
    %s133 = sphi 0, %s131
    %s134 = sphi 0, %s133
    %s148 = sphi 0, %s134
    %s154 = sphi 0, %s156
    %s157 = sphi 0, %s154
    %s158 = sphi 0, %s157
    %s174 = sphi 0, %s158
    %s180 = sphi 0, %s182
    %s183 = sphi 0, %s180
    %s184 = sphi 0, %s183
    %s200 = sphi 0, %s184
  $region4: #{fpn_forward.5} parent=0 // loop_header_branch
    %16 = sbr.rel (%p14) target = $region8
  $region5: #{fpn_forward.5} parent=0 // loop_body
    %s18 = ssub.s32 %s13, 1
    %s19 = ssub.s32 %s13, 2
    %s20 = sadd.s32 %s13, 1
    %s21 = ssub.s32 %s13, %s20
    %p22 = scmp.eq.s32.totalorder %s21, 0
    %s24 = sadd.s32 %s23, 1
    %s25 = scalar_select %p22, %s23, %s24
    %p28 = pneg %p22
    %p29 = scmp.eq.s32.totalorder %s13, 1
    %p30 = por %p28, %p29
    %p31 = scmp.ne.s32.totalorder %s23, %s26
    %p32 = scmp.eq.s32.totalorder %s13, 0
    %p33 = por %p31, %p32
    %p34 = scmp.ne.s32.totalorder %s23, %s26
    %p35 = scmp.eq.s32.totalorder %s18, 1
    %p36 = por %p34, %p35
    %p37 = scmp.ne.s32.totalorder %s26, %s27
    %p38 = scmp.eq.s32.totalorder %s18, 0
    %p39 = por %p37, %p38
    %p40 = scmp.ne.s32.totalorder %s26, %s27
    %p41 = scmp.eq.s32.totalorder %s19, 1
    %p42 = por %p40, %p41
    %p44 = scmp.ne.s32.totalorder %s27, %s43
    %p45 = scmp.eq.s32.totalorder %s19, 0
    %p46 = por %p44, %p45
    %s48 = sadd.s32 %s47, 1
    %p51 = scmp.eq.s32.totalorder %s13, 1
    %p52 = scmp.ne.s32.totalorder %s47, %s49
    %p53 = scmp.eq.s32.totalorder %s13, 0
    %p54 = por %p52, %p53
    %p55 = scmp.ne.s32.totalorder %s47, %s49
    %p56 = scmp.eq.s32.totalorder %s18, 1
    %p57 = por %p55, %p56
    %p58 = scmp.ne.s32.totalorder %s49, %s50
    %p59 = scmp.eq.s32.totalorder %s18, 0
    %p60 = por %p58, %p59
    %p61 = scmp.ne.s32.totalorder %s49, %s50
    %p62 = scmp.eq.s32.totalorder %s19, 1
    %p63 = por %p61, %p62
    %p65 = scmp.ne.s32.totalorder %s50, %s64
    %p66 = scmp.eq.s32.totalorder %s19, 0
    %p67 = por %p65, %p66
    %s69 = sadd.s32 %s68, 1
    %p72 = scmp.eq.s32.totalorder %s13, 1
    %p73 = scmp.ne.s32.totalorder %s68, %s70
    %p74 = scmp.eq.s32.totalorder %s13, 0
    %p75 = por %p73, %p74
    %p76 = scmp.ne.s32.totalorder %s68, %s70
    %p77 = scmp.eq.s32.totalorder %s18, 1
    %p78 = por %p76, %p77
    %p79 = scmp.ne.s32.totalorder %s70, %s71
    %p80 = scmp.eq.s32.totalorder %s18, 0
    %p81 = por %p79, %p80
    %p82 = scmp.ne.s32.totalorder %s70, %s71
    %p83 = scmp.eq.s32.totalorder %s19, 1
    %p84 = por %p82, %p83
    %p86 = scmp.ne.s32.totalorder %s71, %s85
    %p87 = scmp.eq.s32.totalorder %s19, 0
    %p88 = por %p86, %p87
    %s90 = sadd.s32 %s89, 1
    %p93 = scmp.eq.s32.totalorder %s13, 1
    %p94 = scmp.ne.s32.totalorder %s89, %s91
    %p95 = scmp.eq.s32.totalorder %s13, 0
    %p96 = por %p94, %p95
    %p97 = scmp.ne.s32.totalorder %s89, %s91
    %p98 = scmp.eq.s32.totalorder %s18, 1
    %p99 = por %p97, %p98
    %p100 = scmp.ne.s32.totalorder %s91, %s92
    %p101 = scmp.eq.s32.totalorder %s18, 0
    %p102 = por %p100, %p101
    %p103 = scmp.ne.s32.totalorder %s91, %s92
    %p104 = scmp.eq.s32.totalorder %s19, 1
    %p105 = por %p103, %p104
    %p107 = scmp.ne.s32.totalorder %s92, %s106
    %p108 = scmp.eq.s32.totalorder %s19, 0
    %p109 = por %p107, %p108
    %s111 = sadd.s32 %s110, 1
    %p114 = scmp.eq.s32.totalorder %s13, 1
    %p115 = scmp.ne.s32.totalorder %s110, %s112
    %p116 = scmp.eq.s32.totalorder %s13, 0
    %p117 = por %p115, %p116
    %p118 = scmp.ne.s32.totalorder %s110, %s112
    %p119 = scmp.eq.s32.totalorder %s18, 1
    %p120 = por %p118, %p119
    %p121 = scmp.ne.s32.totalorder %s112, %s113
    %p122 = scmp.eq.s32.totalorder %s18, 0
    %p123 = por %p121, %p122
    %p124 = scmp.ne.s32.totalorder %s112, %s113
    %p125 = scmp.eq.s32.totalorder %s19, 1
    %p126 = por %p124, %p125
    %p128 = scmp.ne.s32.totalorder %s113, %s127
    %p129 = scmp.eq.s32.totalorder %s19, 0
    %p130 = por %p128, %p129
    %s132 = sadd.s32 %s131, 1
    %p135 = scmp.eq.s32.totalorder %s13, 1
    %p136 = scmp.ne.s32.totalorder %s131, %s133
    %p137 = scmp.eq.s32.totalorder %s13, 0
    %p138 = por %p136, %p137
    %p139 = scmp.ne.s32.totalorder %s131, %s133
    %p140 = scmp.eq.s32.totalorder %s18, 1
    %p141 = por %p139, %p140
    %p142 = scmp.ne.s32.totalorder %s133, %s134
    %p143 = scmp.eq.s32.totalorder %s18, 0
    %p144 = por %p142, %p143
    %p145 = scmp.ne.s32.totalorder %s133, %s134
    %p146 = scmp.eq.s32.totalorder %s19, 1
    %p147 = por %p145, %p146
    %p149 = scmp.ne.s32.totalorder %s134, %s148
    %p150 = scmp.eq.s32.totalorder %s19, 0
    %p151 = por %p149, %p150
    %s152 = ssub.s32 %s13, %s20
    %p153 = scmp.eq.s32.totalorder %s152, 0
    %s155 = sadd.s32 %s154, 1
    %s156 = scalar_select %p153, %s154, %s155
    %p159 = pneg %p153
    %p160 = scmp.eq.s32.totalorder %s13, 1
    %p161 = por %p159, %p160
    %p162 = scmp.ne.s32.totalorder %s154, %s157
    %p163 = scmp.eq.s32.totalorder %s13, 0
    %p164 = por %p162, %p163
    %p165 = scmp.ne.s32.totalorder %s154, %s157
    %p166 = scmp.eq.s32.totalorder %s18, 1
    %p167 = por %p165, %p166
    %p168 = scmp.ne.s32.totalorder %s157, %s158
    %p169 = scmp.eq.s32.totalorder %s18, 0
    %p170 = por %p168, %p169
    %p171 = scmp.ne.s32.totalorder %s157, %s158
    %p172 = scmp.eq.s32.totalorder %s19, 1
    %p173 = por %p171, %p172
    %p175 = scmp.ne.s32.totalorder %s158, %s174
    %p176 = scmp.eq.s32.totalorder %s19, 0
    %p177 = por %p175, %p176
    %s178 = ssub.s32 %s13, %s20
    %p179 = scmp.eq.s32.totalorder %s178, 0
    %s181 = sadd.s32 %s180, 1
    %s182 = scalar_select %p179, %s180, %s181
    %p185 = pneg %p179
    %p186 = scmp.eq.s32.totalorder %s13, 1
    %p187 = por %p185, %p186
    %p188 = scmp.ne.s32.totalorder %s180, %s183
    %p189 = scmp.eq.s32.totalorder %s13, 0
    %p190 = por %p188, %p189
    %p191 = scmp.ne.s32.totalorder %s180, %s183
    %p192 = scmp.eq.s32.totalorder %s18, 1
    %p193 = por %p191, %p192
    %p194 = scmp.ne.s32.totalorder %s183, %s184
    %p195 = scmp.eq.s32.totalorder %s18, 0
    %p196 = por %p194, %p195
    %p197 = scmp.ne.s32.totalorder %s183, %s184
    %p198 = scmp.eq.s32.totalorder %s19, 1
    %p199 = por %p197, %p198
    %p201 = scmp.ne.s32.totalorder %s184, %s200
    %p202 = scmp.eq.s32.totalorder %s19, 0
    %p203 = por %p201, %p202
    %p204 = scmp.le.s32.totalorder 1, %s13
    %p205 = scmp.lt.s32.totalorder %s13, 3
    %p206 = pnand %p204, %p205
    %p207 = pneg %p206
    // Predicated region
    $region9: #{fpn_forward.5} parent=5 // pred_check
      _
    $region10: #{fpn_forward.5} parent=5 // pred_check_branch
      %209 = sbr.rel (%p206) target = $region12
    $region11: #{fpn_forward.5} parent=5 // pred_region
      %s210 = ssub.s32 %s13, 1
      // Predicated region
      $region13: #{fpn_forward.5} parent=11 // pred_check
        %p211 = pneg %p60
      $region14: #{fpn_forward.5} parent=11 // pred_check_branch
        %213 = sbr.rel (%p211) target = $region16
      $region15: #{fpn_forward.5} parent=11 // pred_region
        _
      $region16: #{fpn_forward.5} parent=11 // pred_fallthru
        _
      // Predicated region
      $region17: #{fpn_forward.5} parent=11 // pred_check
        %p214 = pneg %p81
      $region18: #{fpn_forward.5} parent=11 // pred_check_branch
        %216 = sbr.rel (%p214) target = $region20
      $region19: #{fpn_forward.5} parent=11 // pred_region
        _
      $region20: #{fpn_forward.5} parent=11 // pred_fallthru
        _
      // Predicated region
      $region21: #{fpn_forward.5} parent=11 // pred_check
        %p217 = pneg %p102
      $region22: #{fpn_forward.5} parent=11 // pred_check_branch
        %219 = sbr.rel (%p217) target = $region24
      $region23: #{fpn_forward.5} parent=11 // pred_region
        _
      $region24: #{fpn_forward.5} parent=11 // pred_fallthru
        _
      // Predicated region
      $region25: #{fpn_forward.5} parent=11 // pred_check
        %p220 = pneg %p123
      $region26: #{fpn_forward.5} parent=11 // pred_check_branch
        %222 = sbr.rel (%p220) target = $region28
      $region27: #{fpn_forward.5} parent=11 // pred_region
        _
      $region28: #{fpn_forward.5} parent=11 // pred_fallthru
        _
      // Predicated region
      $region29: #{fpn_forward.5} parent=11 // pred_check
        %p223 = pneg %p144
      $region30: #{fpn_forward.5} parent=11 // pred_check_branch
        %225 = sbr.rel (%p223) target = $region32
      $region31: #{fpn_forward.5} parent=11 // pred_region
        _
      $region32: #{fpn_forward.5} parent=11 // pred_fallthru
        _
    $region12: #{fpn_forward.5} parent=5 // pred_fallthru
      _
    %p226 = scmp.lt.s32.totalorder %s13, 2
    // Predicated region
    $region33: #{fpn_forward.5} parent=5 // pred_check
      %p227 = pneg %p226
    $region34: #{fpn_forward.5} parent=5 // pred_check_branch
      %229 = sbr.rel (%p227) target = $region36
    $region35: #{fpn_forward.5} parent=5 // pred_region
      // Predicated region
      $region37: #{fpn_forward.5} parent=35 // pred_check
        %p230 = pneg %p33
      $region38: #{fpn_forward.5} parent=35 // pred_check_branch
        %232 = sbr.rel (%p230) target = $region40
      $region39: #{fpn_forward.5} parent=35 // pred_region
        %p233 = scmp.lt.s32.totalorder %s13, 1
        %s234 = scalar_select %p233, %s13, 1
        %s235 = smul.addr %s234, 2
        %s236 = smul.addr %s235, 8
        %s237 = scalar_lea.vmem %s0, %s236
      $region40: #{fpn_forward.5} parent=35 // pred_fallthru
        _
      // Predicated region
      $region41: #{fpn_forward.5} parent=35 // pred_check
        %p238 = pneg %p164
      $region42: #{fpn_forward.5} parent=35 // pred_check_branch
        %240 = sbr.rel (%p238) target = $region44
      $region43: #{fpn_forward.5} parent=35 // pred_region
        %p241 = scmp.lt.s32.totalorder %s13, 1
        %s242 = scalar_select %p241, %s13, 1
        %s243 = smul.addr %s242, 4
        %s244 = smul.addr %s243, 8
        %s245 = scalar_lea.vmem %s6, %s244
      $region44: #{fpn_forward.5} parent=35 // pred_fallthru
        _
    $region36: #{fpn_forward.5} parent=5 // pred_fallthru
      _
    %p246 = scmp.le.s32.totalorder 1, %s13
    %p247 = scmp.lt.s32.totalorder %s13, 3
    %p248 = pnand %p246, %p247
    %p249 = pneg %p248
    // Predicated region
    $region45: #{fpn_forward.5} parent=5 // pred_check
      _
    $region46: #{fpn_forward.5} parent=5 // pred_check_branch
      %251 = sbr.rel (%p248) target = $region48
    $region47: #{fpn_forward.5} parent=5 // pred_region
      %s252 = ssub.s32 %s13, 1
      %p253 = scmp.lt.s32.totalorder %s18, 1
      %s254 = scalar_select %p253, %s18, 1
      %s255 = smul.addr %s254, 2
      %s256 = smul.addr %s255, 8
      %s257 = scalar_lea.vmem %s0, %s256
      %p258 = pneg %p39
      %p259 = pneg %p36
      %p260 = pneg %p60
      %p261 = pneg %p57
      %p262 = pneg %p81
      %p263 = pneg %p78
      %p264 = pneg %p102
      %p265 = pneg %p99
      %p266 = pneg %p123
      %p267 = pneg %p120
      %p268 = pneg %p144
      %p269 = pneg %p141
      %p270 = scmp.lt.s32.totalorder %s18, 1
      %s271 = scalar_select %p270, %s18, 1
      %s272 = smul.addr %s271, 4
      %s273 = smul.addr %s272, 8
      %s274 = scalar_lea.vmem %s6, %s273
      %p275 = pneg %p170
      %p276 = pneg %p167
      %p277 = pneg %p196
      %p278 = pneg %p193
      %p279 = scmp.lt.s32.totalorder %s18, 1
      %s280 = scalar_select %p279, %s18, 1
      %s281 = smul.addr %s280, 4
      %s282 = smul.addr %s281, 8
      %s283 = scalar_lea.vmem %s7, %s282
      %p284 = scmp.lt.s32.totalorder %s18, 1
      %s285 = scalar_select %p284, %s18, 1
      %s286 = smul.addr %s285, 2
      %s287 = smul.addr %s286, 8
      %s288 = scalar_lea.vmem %s0, %s287
      %p289 = scmp.lt.s32.totalorder %s18, 1
      %s290 = scalar_select %p289, %s18, 1
      %s291 = smul.addr %s290, 4
      %s292 = smul.addr %s291, 8
      %s293 = scalar_lea.vmem %s6, %s292
      %p294 = scmp.lt.s32.totalorder %s18, 1
      %s295 = scalar_select %p294, %s18, 1
      %s296 = smul.addr %s295, 4
      %s297 = smul.addr %s296, 8
      %s298 = scalar_lea.vmem %s7, %s297
      %v299 = vld [vmem:[%s288] sm:$0xff]
      %v300 = vld [vmem:[%s288 + $0x8] sm:$0xff]
      %s301 = scalar_lea.vmem %s1, 64
      %v302 = vld [vmem:[%s301] sm:$0xff]
      %v303 = vld [vmem:[%s301 + $0x8] sm:$0xff]
      %v304 = vld [vmem:[%s301 + $0x10] sm:$0xff]
      %v305 = vld [vmem:[%s301 + $0x18] sm:$0xff]
      %v306 = vld [vmem:[%s301 + $0x20] sm:$0xff]
      %v307 = vld [vmem:[%s301 + $0x28] sm:$0xff]
      %v308 = vld [vmem:[%s301 + $0x30] sm:$0xff]
      %v309 = vld [vmem:[%s301 + $0x38] sm:$0xff]
      %v310 = vld [vmem:[%s2] sm:$0xff]
      %v311 = vld [vmem:[%s2 + $0x8] sm:$0xff]
      %vm312 = vcmask 130048
      %v314 = vsel %vm312, %v310, 0
      %v317 = vsel %vm312, %v311, 0
      %319 = vmatpush.msra.mxu0 0.0
      %320 = vmatpush.msra.mxu0 0.0
      %321 = vmatpush.msra.mxu0 0.0
      %322 = vmatpush.msra.mxu0 0.0
      %323 = vmatpush.msra.mxu0 0.0
      %324 = vmatpush.msra.mxu0 0.0
      %325 = vmatpush.msra.mxu0 0.0
      %326 = vmatpush.msra.mxu0 0.0
      %327 = vmatpush.msra.mxu0 0.0
      %328 = vmatpush.msra.mxu0 0.0
      %329 = vmatpush.msra.mxu0 0.0
      %330 = vmatpush.msra.mxu0 0.0
      %331 = vmatpush.msra.mxu0 0.0
      %332 = vmatpush.msra.mxu0 0.0
      %333 = vmatpush.msra.mxu0 %v300
      %334 = vmatpush.msra.mxu0 %v299
      %335 = vmatmul.f32.gmra.mxu0 %v314
      %v336 = vpop.f32.mrf.mxu0
      %v337 = vadd.f32 0.0, %v336
      %338 = vmatmul.f32.gmra.mxu0 %v317
      %v339 = vpop.f32.mrf.mxu0
      %v340 = vadd.f32 0.0, %v339
      %341 = vdwg.mxu0
      %v342 = vld [vmem:[%s1] sm:$0xff]
      %v343 = vld [vmem:[%s1 + $0x8] sm:$0xff]
      %v344 = vld [vmem:[%s1 + $0x10] sm:$0xff]
      %v345 = vld [vmem:[%s1 + $0x18] sm:$0xff]
      %v346 = vld [vmem:[%s1 + $0x20] sm:$0xff]
      %v347 = vld [vmem:[%s1 + $0x28] sm:$0xff]
      %v348 = vld [vmem:[%s1 + $0x30] sm:$0xff]
      %v349 = vld [vmem:[%s1 + $0x38] sm:$0xff]
      %vm350 = vcmask 523264
      %v352 = vsel %vm350, %v337, 0
      %v355 = vsel %vm350, %v340, 0
      %357 = vmatpush.msra.mxu0 0.0
      %358 = vmatpush.msra.mxu0 0.0
      %359 = vmatpush.msra.mxu0 0.0
      %360 = vmatpush.msra.mxu0 0.0
      %361 = vmatpush.msra.mxu0 0.0
      %362 = vmatpush.msra.mxu0 0.0
      %363 = vmatpush.msra.mxu0 0.0
      %364 = vmatpush.msra.mxu0 0.0
      %365 = vmatpush.msra.mxu0 %v349
      %366 = vmatpush.msra.mxu0 %v348
      %367 = vmatpush.msra.mxu0 %v347
      %368 = vmatpush.msra.mxu0 %v346
      %369 = vmatpush.msra.mxu0 %v345
      %370 = vmatpush.msra.mxu0 %v344
      %371 = vmatpush.msra.mxu0 %v343
      %372 = vmatpush.msra.mxu0 %v342
      %373 = vmatmul.f32.gmra.mxu0 %v352
      %v374 = vpop.f32.mrf.mxu0
      %v375 = vadd.f32 0.0, %v374
      %376 = vmatmul.f32.gmra.mxu0 %v355
      %v377 = vpop.f32.mrf.mxu0
      %v378 = vadd.f32 0.0, %v377
      %379 = vdwg.mxu0
      %v381 = vsel %vm350, %v299, 0
      %v384 = vsel %vm350, %v300, 0
      %386 = vmatpush.msra.mxu0 0.0
      %387 = vmatpush.msra.mxu0 0.0
      %388 = vmatpush.msra.mxu0 0.0
      %389 = vmatpush.msra.mxu0 0.0
      %390 = vmatpush.msra.mxu0 0.0
      %391 = vmatpush.msra.mxu0 0.0
      %392 = vmatpush.msra.mxu0 0.0
      %393 = vmatpush.msra.mxu0 0.0
      %394 = vmatpush.msra.mxu0 %v309
      %395 = vmatpush.msra.mxu0 %v308
      %396 = vmatpush.msra.mxu0 %v307
      %397 = vmatpush.msra.mxu0 %v306
      %398 = vmatpush.msra.mxu0 %v305
      %399 = vmatpush.msra.mxu0 %v304
      %400 = vmatpush.msra.mxu0 %v303
      %401 = vmatpush.msra.mxu0 %v302
      %402 = vmatmul.f32.gmra.mxu0 %v381
      %v403 = vpop.f32.mrf.mxu0
      %v404 = vadd.f32 %v375, %v403
      %405 = vmatmul.f32.gmra.mxu0 %v384
      %v406 = vpop.f32.mrf.mxu0
      %v407 = vadd.f32 %v378, %v406
      %408 = vdwg.mxu0
      %s409 = scalar_lea.vmem %s2, 16
      %v410 = vld [vmem:[%s409] sm:$0xff]
      %v411 = vld [vmem:[%s409 + $0x8] sm:$0xff]
      %v413 = vsel %vm312, %v410, 0
      %v416 = vsel %vm312, %v411, 0
      %418 = vmatpush.msra.mxu0 0.0
      %419 = vmatpush.msra.mxu0 0.0
      %420 = vmatpush.msra.mxu0 0.0
      %421 = vmatpush.msra.mxu0 0.0
      %422 = vmatpush.msra.mxu0 0.0
      %423 = vmatpush.msra.mxu0 0.0
      %424 = vmatpush.msra.mxu0 0.0
      %425 = vmatpush.msra.mxu0 0.0
      %426 = vmatpush.msra.mxu0 0.0
      %427 = vmatpush.msra.mxu0 0.0
      %428 = vmatpush.msra.mxu0 0.0
      %429 = vmatpush.msra.mxu0 0.0
      %430 = vmatpush.msra.mxu0 0.0
      %431 = vmatpush.msra.mxu0 0.0
      %432 = vmatpush.msra.mxu0 %v300
      %433 = vmatpush.msra.mxu0 %v299
      %434 = vmatmul.f32.gmra.mxu0 %v413
      %v435 = vpop.f32.mrf.mxu0
      %v436 = vadd.f32 0.0, %v435
      %437 = vmatmul.f32.gmra.mxu0 %v416
      %v438 = vpop.f32.mrf.mxu0
      %v439 = vadd.f32 0.0, %v438
      %440 = vdwg.mxu0
      %s441 = scalar_lea.vmem %s1, 128
      %v442 = vld [vmem:[%s441] sm:$0xff]
      %v443 = vld [vmem:[%s441 + $0x8] sm:$0xff]
      %v444 = vld [vmem:[%s441 + $0x10] sm:$0xff]
      %v445 = vld [vmem:[%s441 + $0x18] sm:$0xff]
      %v446 = vld [vmem:[%s441 + $0x20] sm:$0xff]
      %v447 = vld [vmem:[%s441 + $0x28] sm:$0xff]
      %v448 = vld [vmem:[%s441 + $0x30] sm:$0xff]
      %v449 = vld [vmem:[%s441 + $0x38] sm:$0xff]
      %v451 = vsel %vm350, %v436, 0
      %v454 = vsel %vm350, %v439, 0
      %456 = vmatpush.msra.mxu0 0.0
      %457 = vmatpush.msra.mxu0 0.0
      %458 = vmatpush.msra.mxu0 0.0
      %459 = vmatpush.msra.mxu0 0.0
      %460 = vmatpush.msra.mxu0 0.0
      %461 = vmatpush.msra.mxu0 0.0
      %462 = vmatpush.msra.mxu0 0.0
      %463 = vmatpush.msra.mxu0 0.0
      %464 = vmatpush.msra.mxu0 %v449
      %465 = vmatpush.msra.mxu0 %v448
      %466 = vmatpush.msra.mxu0 %v447
      %467 = vmatpush.msra.mxu0 %v446
      %468 = vmatpush.msra.mxu0 %v445
      %469 = vmatpush.msra.mxu0 %v444
      %470 = vmatpush.msra.mxu0 %v443
      %471 = vmatpush.msra.mxu0 %v442
      %472 = vmatmul.f32.gmra.mxu0 %v451
      %v473 = vpop.f32.mrf.mxu0
      %v474 = vadd.f32 0.0, %v473
      %475 = vmatmul.f32.gmra.mxu0 %v454
      %v476 = vpop.f32.mrf.mxu0
      %v477 = vadd.f32 0.0, %v476
      %478 = vdwg.mxu0
      %v479 = vadd.f32 %v404, %v474
      %v480 = vadd.f32 %v407, %v477
      %v481 = vld [vmem:[%s3] sm:$0x1]
      %v483 = vperm.slane %v481, 0
      %v485 = vadd.f32 %v479, %v483
      %v486 = vadd.f32 %v480, %v483
      %v487 = vmax.f32 %v485, 0.0
      %v488 = vmax.f32 %v486, 0.0
      %v489 = vld [vmem:[%s4] sm:$0xff]
      %v490 = vld [vmem:[%s4 + $0x8] sm:$0xff]
      %v491 = vld [vmem:[%s4 + $0x10] sm:$0xff]
      %v492 = vld [vmem:[%s4 + $0x18] sm:$0xff]
      %v494 = vsel %vm312, %v489, 0
      %v497 = vsel %vm312, %v490, 0
      %v500 = vsel %vm312, %v491, 0
      %v503 = vsel %vm312, %v492, 0
      %505 = vmatpush.msra.mxu0 0.0
      %506 = vmatpush.msra.mxu0 0.0
      %507 = vmatpush.msra.mxu0 0.0
      %508 = vmatpush.msra.mxu0 0.0
      %509 = vmatpush.msra.mxu0 0.0
      %510 = vmatpush.msra.mxu0 0.0
      %511 = vmatpush.msra.mxu0 0.0
      %512 = vmatpush.msra.mxu0 0.0
      %513 = vmatpush.msra.mxu0 0.0
      %514 = vmatpush.msra.mxu0 0.0
      %515 = vmatpush.msra.mxu0 0.0
      %516 = vmatpush.msra.mxu0 0.0
      %517 = vmatpush.msra.mxu0 0.0
      %518 = vmatpush.msra.mxu0 0.0
      %519 = vmatpush.msra.mxu0 %v488
      %520 = vmatpush.msra.mxu0 %v487
      %521 = vmatmul.f32.gmra.mxu0 %v494
      %v522 = vpop.f32.mrf.mxu0
      %v523 = vadd.f32 0.0, %v522
      %524 = vmatmul.f32.gmra.mxu0 %v497
      %v525 = vpop.f32.mrf.mxu0
      %v526 = vadd.f32 0.0, %v525
      %527 = vmatmul.f32.gmra.mxu0 %v500
      %v528 = vpop.f32.mrf.mxu0
      %v529 = vadd.f32 0.0, %v528
      %530 = vmatmul.f32.gmra.mxu0 %v503
      %v531 = vpop.f32.mrf.mxu0
      %v532 = vadd.f32 0.0, %v531
      %533 = vdwg.mxu0
      %v534 = vld [vmem:[%s5] sm:$0xff]
      %v535 = vld [vmem:[%s5 + $0x8] sm:$0xff]
      %v536 = vld [vmem:[%s5 + $0x10] sm:$0xff]
      %v537 = vld [vmem:[%s5 + $0x18] sm:$0xff]
      %v538 = vld [vmem:[%s5 + $0x20] sm:$0xff]
      %v539 = vld [vmem:[%s5 + $0x28] sm:$0xff]
      %v540 = vld [vmem:[%s5 + $0x30] sm:$0xff]
      %v541 = vld [vmem:[%s5 + $0x38] sm:$0xff]
      %v542 = vld [vmem:[%s293] sm:$0xff]
      %v543 = vld [vmem:[%s293 + $0x8] sm:$0xff]
      %v544 = vld [vmem:[%s293 + $0x10] sm:$0xff]
      %v545 = vld [vmem:[%s293 + $0x18] sm:$0xff]
      %v547 = vsel %vm350, %v523, 0
      %v550 = vsel %vm350, %v526, 0
      %v553 = vsel %vm350, %v529, 0
      %v556 = vsel %vm350, %v532, 0
      %558 = vmatpush.msra.mxu0 0.0
      %559 = vmatpush.msra.mxu0 0.0
      %560 = vmatpush.msra.mxu0 0.0
      %561 = vmatpush.msra.mxu0 0.0
      %562 = vmatpush.msra.mxu0 0.0
      %563 = vmatpush.msra.mxu0 0.0
      %564 = vmatpush.msra.mxu0 0.0
      %565 = vmatpush.msra.mxu0 0.0
      %566 = vmatpush.msra.mxu0 %v541
      %567 = vmatpush.msra.mxu0 %v540
      %568 = vmatpush.msra.mxu0 %v539
      %569 = vmatpush.msra.mxu0 %v538
      %570 = vmatpush.msra.mxu0 %v537
      %571 = vmatpush.msra.mxu0 %v536
      %572 = vmatpush.msra.mxu0 %v535
      %573 = vmatpush.msra.mxu0 %v534
      %574 = vmatmul.f32.gmra.mxu0 %v547
      %v575 = vpop.f32.mrf.mxu0
      %v576 = vadd.f32 %v542, %v575
      %577 = vmatmul.f32.gmra.mxu0 %v550
      %v578 = vpop.f32.mrf.mxu0
      %v579 = vadd.f32 %v543, %v578
      %580 = vmatmul.f32.gmra.mxu0 %v553
      %v581 = vpop.f32.mrf.mxu0
      %v582 = vadd.f32 %v544, %v581
      %583 = vmatmul.f32.gmra.mxu0 %v556
      %v584 = vpop.f32.mrf.mxu0
      %v585 = vadd.f32 %v545, %v584
      %586 = vdwg.mxu0
      %587 = vst [vmem:[%s298] sm:$0xff] %v576
      %588 = vst [vmem:[%s298 + $0x8] sm:$0xff] %v579
      %589 = vst [vmem:[%s298 + $0x10] sm:$0xff] %v582
      %590 = vst [vmem:[%s298 + $0x18] sm:$0xff] %v585
      %p591 = scmp.lt.s32.totalorder %s18, 1
      %s592 = scalar_select %p591, %s18, 1
      %s593 = smul.addr %s592, 4
      %s594 = smul.addr %s593, 8
      %s595 = scalar_lea.vmem %s7, %s594
      // Predicated region
      $region49: #{fpn_forward.5} parent=47 // pred_check
        %p596 = pneg %p193
      $region50: #{fpn_forward.5} parent=47 // pred_check_branch
        %598 = sbr.rel (%p596) target = $region52
      $region51: #{fpn_forward.5} parent=47 // pred_region
        _
      $region52: #{fpn_forward.5} parent=47 // pred_fallthru
        _
    $region48: #{fpn_forward.5} parent=5 // pred_fallthru
      _
    %p599 = scmp.le.s32.totalorder 2, %s13
    // Predicated region
    $region53: #{fpn_forward.5} parent=5 // pred_check
      %p600 = pneg %p599
    $region54: #{fpn_forward.5} parent=5 // pred_check_branch
      %602 = sbr.rel (%p600) target = $region56
    $region55: #{fpn_forward.5} parent=5 // pred_region
      %s603 = ssub.s32 %s13, 2
      // Predicated region
      $region57: #{fpn_forward.5} parent=55 // pred_check
        %p604 = pneg %p199
      $region58: #{fpn_forward.5} parent=55 // pred_check_branch
        %606 = sbr.rel (%p604) target = $region60
      $region59: #{fpn_forward.5} parent=55 // pred_region
        %p607 = scmp.lt.s32.totalorder %s19, 1
        %s608 = scalar_select %p607, %s19, 1
        %s609 = smul.addr %s608, 4
        %s610 = smul.addr %s609, 8
        %s611 = scalar_lea.vmem %s7, %s610
      $region60: #{fpn_forward.5} parent=55 // pred_fallthru
        _
    $region56: #{fpn_forward.5} parent=5 // pred_fallthru
      _
  $region6: #{fpn_forward.5} parent=0 // loop_footer
    %s17 = sadd.s32 1, %s13
  $region7: #{fpn_forward.5} parent=0 // loop_footer_branch
    %12 = sbr.rel target = $region3
  $region8: #{fpn_forward.5} parent=0 // loop_exit
    _

</llo_original>
